<compile_context>
chip_gen: v5e
topology: v5e:2x2
jax: 0.10.0
libtpu: 0.0.40
codegen_flags: <defaults>
</compile_context>

<pallas_src>
import functools

import numpy as np

import jax
import jax.numpy as jnp
from jax import lax
from jax.experimental import pallas as pl
from jax.experimental.pallas import tpu as pltpu


def _decoder_kernel(
    enc_ref,      # (B, S, M)         encoder hidden states
    attn_ref,     # (M + 2P + 2, M)   [U_d.T ; W_d.T ; W_d.bias ; v_d]
    gate_ref,     # (M + P + 1, 4P)   [w_cg ; w_hh.T ; fused gate bias], i/f/o cols * 0.5
    head_ref,     # (P + M, 1)        W_y.T @ v_y.T
    head_b_ref,   # (1,) SMEM         v_y @ W_y.bias + v_y.bias (folded scalar)
    out_ref,      # (B, 1)
    *, M: int, P: int, T: int,
):
    f32 = jnp.float32
    enc = enc_ref[...]                                 # (B, S, M)
    B, S, _ = enc.shape

    udT = attn_ref[0:M, :]                             # (M, M)
    wdT = attn_ref[M:M + 2 * P, :]                     # (2P, M)  stacked [d ; s] weight
    wd_b = attn_ref[M + 2 * P:M + 2 * P + 1, :]        # (1, M)
    vd_row = attn_ref[M + 2 * P + 1:M + 2 * P + 2, :]  # (1, M)

    w_cg = gate_ref[0:M, :]                            # (M, 4P)  context -> gate preacts
    whh = gate_ref[M:M + P, :]                         # (P, 4P)
    b_g = gate_ref[M + P:M + P + 1, :]                 # (1, 4P)

    # Loop-invariant: U_d(enc) as one (B*S, M) @ (M, M) MXU dot, W_d bias folded in once
    # so the per-step +bias add disappears from the serial chain.
    y1 = jnp.dot(enc.reshape(B * S, M), udT,
                 preferred_element_type=f32).reshape(B, S, M)
    y1 = y1 + wd_b.reshape(1, 1, M)

    # Hoist loop-invariant broadcasts (JAX does not CSE broadcast_in_dim).
    vd_b = jnp.broadcast_to(vd_row.reshape(1, 1, M), (B, S, M))
    b_g_b = jnp.broadcast_to(b_g, (B, 4 * P))

    d0 = jnp.zeros((B, P), f32)      # decoder hidden state d_{t-1}
    s0 = jnp.zeros((B, P), f32)      # decoder cell state   s'_{t-1}
    c0 = jnp.zeros((B, M), f32)      # context c_t

    def step(_, carry):
        d, s, c = carry
        # --- temporal attention over encoder states ---
        ds = jnp.concatenate([d, s], axis=1)                       # (B, 2P)
        x1 = jnp.dot(ds, wdT, preferred_element_type=f32)          # (B, M)  single dot
        z1 = jnp.tanh(x1[:, None, :] + y1)                         # (B, S, M)
        # keepdims keeps l/e in the layout the lane-reduce produces (no relayout).
        l = jnp.sum(z1 * vd_b, axis=-1, keepdims=True)             # (B, S, 1) == v_d(z1)
        m = jnp.max(l, axis=1, keepdims=True)                      # (B, 1, 1)
        e = jnp.exp(l - m)                                         # (B, S, 1)
        # Deferred normalization: reciprocal (EUP) overlaps the weighted-sum reduce.
        denom = jnp.sum(e, axis=1)                                 # (B, 1)
        c_un = jnp.sum(e * enc, axis=1)                            # (B, M)
        c_new = c_un * pl.reciprocal(denom, approx=True)           # (B, M)
        # --- LSTM cell: hidden_term depends only on d, so it schedules under the
        # attention block; only the c_new @ w_cg dot sits on the serial chain.
        hidden_term = jnp.dot(d, whh, preferred_element_type=f32) + b_g_b   # (B, 4P)
        pre = jnp.dot(c_new, w_cg, preferred_element_type=f32) + hidden_term
        # One EUP pass: i/f/o columns were pre-scaled by 0.5 in the wrapper, so
        # sigmoid(x) = 0.5 * tanh(x/2) + 0.5 is recovered with a VPU affine.
        t = jnp.tanh(pre)                                          # (B, 4P)
        h = 0.5 * t + 0.5
        gi = h[:, 0 * P:1 * P]
        gf = h[:, 1 * P:2 * P]
        gg = t[:, 2 * P:3 * P]
        go = h[:, 3 * P:4 * P]
        s_new = gf * s + gi * gg
        d_new = go * jnp.tanh(s_new)
        return d_new, s_new, c_new

    d, s, c = lax.fori_loop(0, T, step, (d0, s0, c0), unroll=min(T, 8))

    # --- output head: v_y(W_y([d ; c])) collapsed to a matvec + folded scalar bias ---
    dc = jnp.concatenate([d, c], axis=1)                           # (B, P + M)
    out = jnp.dot(dc, head_ref[...], preferred_element_type=f32) + head_b_ref[0]
    out_ref[...] = out.astype(out_ref.dtype)


def temporal_attention_decoder(encoded_inputs, params, T):
    """encoded_inputs: (B, S, M) float32. Returns (B, 1) float32."""
    B, S, M = encoded_inputs.shape
    P = params["lstm_w_hh"].shape[1]
    f32 = jnp.float32

    # --- attention slab: [U_d.T ; W_d.T ; W_d.bias ; v_d]  -> (M + 2P + 2, M) ---
    udT = params["U_d_w"].astype(f32).T                 # (M, M)
    wdT = params["W_d_w"].astype(f32).T                 # (2P, M) stacked [d ; s] weight
    wd_b = params["W_d_b"].astype(f32)[None, :]         # (1, M)
    vd = params["v_d_w"].astype(f32)                    # (1, M)
    attn_w = jnp.concatenate([udT, wdT, wd_b, vd], axis=0)

    # --- gate slab: gates_pre = c @ w_cg + d @ w_hh.T + b_g, gate order i|f|g|o ---
    w_ih = params["lstm_w_ih"].astype(f32)              # (4P, 1)
    wih_row = w_ih[:, 0][None, :]                       # (1, 4P)
    w_hh = params["lstm_w_hh"].astype(f32)              # (4P, P)
    wt_w = params["w_tilda_w"].astype(f32)              # (1, M)
    wt_b = params["w_tilda_b"].astype(f32)              # (1,)
    w_cg = wt_w.T @ wih_row                             # (M, 4P) folds w_tilda into w_ih
    whh = w_hh.T                                        # (P, 4P)
    b_g = ((params["lstm_b_ih"] + params["lstm_b_hh"]).astype(f32)[None, :]
           + wt_b[0] * wih_row)                         # (1, 4P) fused gate bias
    # Pre-scale i/f/o columns by 0.5 so a single tanh over the 4P block yields the
    # sigmoids via 0.5*tanh + 0.5 (one EUP pass per step instead of two).
    half = jnp.full((P,), 0.5, f32)
    one = jnp.ones((P,), f32)
    gate_scale = jnp.concatenate([half, half, one, half])[None, :]   # (1, 4P)
    gate_w = jnp.concatenate(
        [w_cg * gate_scale, whh * gate_scale, b_g * gate_scale], axis=0)

    # --- output head: v_y(W_y(x)) = x @ (W_y.T v_y.T) + (v_y W_y.b + v_y.b) ---
    wy = params["W_y_w"].astype(f32)                    # (P, P + M)
    vy = params["v_y_w"].astype(f32)                    # (1, P)
    head_w = wy.T @ vy.T                                # (P + M, 1)
    head_b = (vy[0] @ params["W_y_b"].astype(f32)
              + params["v_y_b"].astype(f32)[0]).reshape(1)           # (1,)

    inputs = (encoded_inputs.astype(f32), attn_w, gate_w, head_w, head_b)

    vmem = pl.BlockSpec(memory_space=pltpu.MemorySpace.VMEM)
    smem = pl.BlockSpec(memory_space=pltpu.MemorySpace.SMEM)

    return pl.pallas_call(
        functools.partial(_decoder_kernel, M=M, P=P, T=T),
        out_shape=jax.ShapeDtypeStruct((B, 1), f32),
        in_specs=[vmem, vmem, vmem, vmem, smem],
        out_specs=vmem,
    )(*inputs)


def reference(enc, p, T):
    """Pure-JAX replica of the PyTorch forward, for correctness checking."""
    B, S, M = enc.shape
    P = p["lstm_w_hh"].shape[1]
    d = jnp.zeros((B, P), jnp.float32)
    s = jnp.zeros((B, P), jnp.float32)
    c = jnp.zeros((B, M), jnp.float32)
    for _ in range(T):
        ds = jnp.concatenate([d, s], axis=1)
        x1 = ds @ p["W_d_w"].T + p["W_d_b"]
        y1 = enc @ p["U_d_w"].T
        z1 = jnp.tanh(x1[:, None, :] + y1)
        l = z1 @ p["v_d_w"].T                               # (B, S, 1)
        beta = jax.nn.softmax(l, axis=1)
        c = jnp.sum(beta * enc, axis=1)
        y_t = c @ p["w_tilda_w"].T + p["w_tilda_b"]
        gates = (y_t @ p["lstm_w_ih"].T + p["lstm_b_ih"]
                 + d @ p["lstm_w_hh"].T + p["lstm_b_hh"])
        i, f, g, o = jnp.split(gates, 4, axis=1)
        s = jax.nn.sigmoid(f) * s + jax.nn.sigmoid(i) * jnp.tanh(g)
        d = jax.nn.sigmoid(o) * jnp.tanh(s)
    dc = jnp.concatenate([d, c], axis=1)
    return (dc @ p["W_y_w"].T + p["W_y_b"]) @ p["v_y_w"].T + p["v_y_b"]


if __name__ == "__main__":
    B, S, M, P, T = 2, 8, 32, 32, 8
    key = jax.random.PRNGKey(0)
    keys = jax.random.split(key, 16)

    def init(k, shape, scale=0.1):
        return (scale * jax.random.normal(k, shape)).astype(jnp.float32)

    params = {
        "lstm_w_ih": init(keys[0], (4 * P, 1)),
        "lstm_w_hh": init(keys[1], (4 * P, P)),
        "lstm_b_ih": init(keys[2], (4 * P,)),
        "lstm_b_hh": init(keys[3], (4 * P,)),
        "W_d_w": init(keys[4], (M, 2 * P)),
        "W_d_b": init(keys[5], (M,)),
        "U_d_w": init(keys[6], (M, M)),
        "v_d_w": init(keys[7], (1, M)),
        "w_tilda_w": init(keys[8], (1, M)),
        "w_tilda_b": init(keys[9], (1,)),
        "W_y_w": init(keys[10], (P, P + M)),
        "W_y_b": init(keys[11], (P,)),
        "v_y_w": init(keys[12], (1, P)),
        "v_y_b": init(keys[13], (1,)),
    }
    enc = jax.random.normal(keys[14], (B, S, M), jnp.float32)

    out = temporal_attention_decoder(enc, params, T)
    jax.block_until_ready(out)
    assert out.shape == (B, 1)

    ref = reference(enc, params, T)
    np.testing.assert_allclose(np.asarray(out), np.asarray(ref), atol=1e-2, rtol=1e-2)

    print("KERNEL_OK")
</pallas_src>

<mosaic_0001>
module attributes {stable_mosaic.version = 11 : i64} {
  func.func @_decoder_kernel(%arg0: memref<2x8x32xf32, #tpu.memory_space<vmem>>, %arg1: memref<98x32xf32, #tpu.memory_space<vmem>>, %arg2: memref<65x128xf32, #tpu.memory_space<vmem>>, %arg3: memref<64x1xf32, #tpu.memory_space<vmem>>, %arg4: memref<1xf32, #tpu.memory_space<smem>>, %arg5: memref<2x1xf32, #tpu.memory_space<vmem>>) attributes {dimension_semantics = [], scalar_prefetch = 0 : i64, scratch_operands = 0 : i64, tpu.core_type = #tpu.core_type<tc>} {
    %c0 = arith.constant 0 : index
    %c0_0 = arith.constant 0 : index
    %c0_1 = arith.constant 0 : index
    %0 = vector.load %arg0[%c0, %c0_0, %c0_1] : memref<2x8x32xf32, #tpu.memory_space<vmem>>, vector<2x8x32xf32>
    %c0_2 = arith.constant 0 : index
    %c0_3 = arith.constant 0 : index
    %1 = vector.load %arg1[%c0_2, %c0_3] : memref<98x32xf32, #tpu.memory_space<vmem>>, vector<32x32xf32>
    %c32 = arith.constant 32 : index
    %c0_4 = arith.constant 0 : index
    %2 = vector.load %arg1[%c32, %c0_4] : memref<98x32xf32, #tpu.memory_space<vmem>>, vector<64x32xf32>
    %c96 = arith.constant 96 : index
    %c0_5 = arith.constant 0 : index
    %3 = vector.load %arg1[%c96, %c0_5] : memref<98x32xf32, #tpu.memory_space<vmem>>, vector<1x32xf32>
    %c97 = arith.constant 97 : index
    %c0_6 = arith.constant 0 : index
    %4 = vector.load %arg1[%c97, %c0_6] : memref<98x32xf32, #tpu.memory_space<vmem>>, vector<1x32xf32>
    %c0_7 = arith.constant 0 : index
    %c0_8 = arith.constant 0 : index
    %5 = vector.load %arg2[%c0_7, %c0_8] : memref<65x128xf32, #tpu.memory_space<vmem>>, vector<32x128xf32>
    %c32_9 = arith.constant 32 : index
    %c0_10 = arith.constant 0 : index
    %6 = vector.load %arg2[%c32_9, %c0_10] : memref<65x128xf32, #tpu.memory_space<vmem>>, vector<32x128xf32>
    %c64 = arith.constant 64 : index
    %c0_11 = arith.constant 0 : index
    %7 = vector.load %arg2[%c64, %c0_11] : memref<65x128xf32, #tpu.memory_space<vmem>>, vector<1x128xf32>
    %8 = vector.shape_cast %0 : vector<2x8x32xf32> to vector<16x32xf32>
    %cst = arith.constant dense<0.000000e+00> : vector<16x32xf32>
    %9 = tpu.matmul %8, %1, %cst {dimension_numbers = #tpu.dot_dimension_numbers<[1], [0], [0], [1], [0, 0, 1, 1], [], []>} : vector<16x32xf32>, vector<32x32xf32>, vector<16x32xf32> -> vector<16x32xf32>
    %10 = vector.shape_cast %9 : vector<16x32xf32> to vector<2x8x32xf32>
    %11 = vector.shape_cast %3 : vector<1x32xf32> to vector<1x1x32xf32>
    %12 = vector.broadcast %11 : vector<1x1x32xf32> to vector<2x8x32xf32>
    %13 = arith.addf %10, %12 : vector<2x8x32xf32>
    %14 = vector.shape_cast %4 : vector<1x32xf32> to vector<1x1x32xf32>
    %15 = vector.shape_cast %14 : vector<1x1x32xf32> to vector<1x1x32xf32>
    %16 = vector.broadcast %15 : vector<1x1x32xf32> to vector<2x8x32xf32>
    %17 = vector.shape_cast %7 : vector<1x128xf32> to vector<1x128xf32>
    %18 = vector.broadcast %17 : vector<1x128xf32> to vector<2x128xf32>
    %cst_12 = arith.constant 0.000000e+00 : f32
    %19 = vector.broadcast %cst_12 : f32 to vector<2x32xf32>
    %cst_13 = arith.constant 0.000000e+00 : f32
    %20 = vector.broadcast %cst_13 : f32 to vector<2x32xf32>
    %cst_14 = arith.constant 0.000000e+00 : f32
    %21 = vector.broadcast %cst_14 : f32 to vector<2x32xf32>
    %c0_i32 = arith.constant 0 : i32
    %22 = tpu.concatenate %19, %20 in 1 : vector<2x32xf32>, vector<2x32xf32> -> vector<2x64xf32>
    %cst_15 = arith.constant dense<0.000000e+00> : vector<2x32xf32>
    %23 = tpu.matmul %22, %2, %cst_15 {dimension_numbers = #tpu.dot_dimension_numbers<[1], [0], [0], [1], [0, 0, 1, 1], [], []>} : vector<2x64xf32>, vector<64x32xf32>, vector<2x32xf32> -> vector<2x32xf32>
    %24 = vector.shape_cast %23 : vector<2x32xf32> to vector<2x1x32xf32>
    %25 = vector.broadcast %24 : vector<2x1x32xf32> to vector<2x8x32xf32>
    %26 = arith.addf %25, %13 : vector<2x8x32xf32>
    %27 = math.tanh %26 : vector<2x8x32xf32>
    %28 = arith.mulf %27, %16 : vector<2x8x32xf32>
    %cst_16 = arith.constant dense<0.000000e+00> : vector<2x8xf32>
    %29 = vector.multi_reduction <add>, %28, %cst_16 [2] : vector<2x8x32xf32> to vector<2x8xf32>
    %30 = vector.shape_cast %29 : vector<2x8xf32> to vector<2x8x1xf32>
    %cst_17 = arith.constant dense<0xFF800000> : vector<2x1xf32>
    %31 = vector.multi_reduction <maximumf>, %30, %cst_17 [1] : vector<2x8x1xf32> to vector<2x1xf32>
    %32 = vector.shape_cast %31 : vector<2x1xf32> to vector<2x1x1xf32>
    %33 = vector.broadcast %32 : vector<2x1x1xf32> to vector<2x8x1xf32>
    %34 = arith.subf %30, %33 : vector<2x8x1xf32>
    %35 = math.exp %34 : vector<2x8x1xf32>
    %cst_18 = arith.constant dense<0.000000e+00> : vector<2x1xf32>
    %36 = vector.multi_reduction <add>, %35, %cst_18 [1] : vector<2x8x1xf32> to vector<2x1xf32>
    %37 = vector.broadcast %35 : vector<2x8x1xf32> to vector<2x8x32xf32>
    %38 = arith.mulf %37, %0 : vector<2x8x32xf32>
    %cst_19 = arith.constant dense<0.000000e+00> : vector<2x32xf32>
    %39 = vector.multi_reduction <add>, %38, %cst_19 [1] : vector<2x8x32xf32> to vector<2x32xf32>
    %40 = tpu.reciprocal %36 {approx = true} : vector<2x1xf32> -> vector<2x1xf32>
    %41 = vector.broadcast %40 : vector<2x1xf32> to vector<2x32xf32>
    %42 = arith.mulf %39, %41 : vector<2x32xf32>
    %cst_20 = arith.constant dense<0.000000e+00> : vector<2x128xf32>
    %43 = tpu.matmul %19, %6, %cst_20 {dimension_numbers = #tpu.dot_dimension_numbers<[1], [0], [0], [1], [0, 0, 1, 1], [], []>} : vector<2x32xf32>, vector<32x128xf32>, vector<2x128xf32> -> vector<2x128xf32>
    %44 = arith.addf %43, %18 : vector<2x128xf32>
    %cst_21 = arith.constant dense<0.000000e+00> : vector<2x128xf32>
    %45 = tpu.matmul %42, %5, %cst_21 {dimension_numbers = #tpu.dot_dimension_numbers<[1], [0], [0], [1], [0, 0, 1, 1], [], []>} : vector<2x32xf32>, vector<32x128xf32>, vector<2x128xf32> -> vector<2x128xf32>
    %46 = arith.addf %45, %44 : vector<2x128xf32>
    %47 = math.tanh %46 : vector<2x128xf32>
    %cst_22 = arith.constant 5.000000e-01 : f32
    %48 = vector.broadcast %cst_22 : f32 to vector<2x128xf32>
    %49 = arith.mulf %48, %47 : vector<2x128xf32>
    %cst_23 = arith.constant 5.000000e-01 : f32
    %50 = vector.broadcast %cst_23 : f32 to vector<2x128xf32>
    %51 = arith.addf %49, %50 : vector<2x128xf32>
    %52 = vector.extract_strided_slice %51 {offsets = [0, 0], sizes = [2, 32], strides = [1, 1]} : vector<2x128xf32> to vector<2x32xf32>
    %53 = vector.extract_strided_slice %51 {offsets = [0, 32], sizes = [2, 32], strides = [1, 1]} : vector<2x128xf32> to vector<2x32xf32>
    %54 = vector.extract_strided_slice %47 {offsets = [0, 64], sizes = [2, 32], strides = [1, 1]} : vector<2x128xf32> to vector<2x32xf32>
    %55 = vector.extract_strided_slice %51 {offsets = [0, 96], sizes = [2, 32], strides = [1, 1]} : vector<2x128xf32> to vector<2x32xf32>
    %56 = arith.mulf %53, %20 : vector<2x32xf32>
    %57 = arith.mulf %52, %54 : vector<2x32xf32>
    %58 = arith.addf %56, %57 : vector<2x32xf32>
    %59 = math.tanh %58 : vector<2x32xf32>
    %60 = arith.mulf %55, %59 : vector<2x32xf32>
    %c1_i32 = arith.constant 1 : i32
    %61 = tpu.concatenate %60, %58 in 1 : vector<2x32xf32>, vector<2x32xf32> -> vector<2x64xf32>
    %cst_24 = arith.constant dense<0.000000e+00> : vector<2x32xf32>
    %62 = tpu.matmul %61, %2, %cst_24 {dimension_numbers = #tpu.dot_dimension_numbers<[1], [0], [0], [1], [0, 0, 1, 1], [], []>} : vector<2x64xf32>, vector<64x32xf32>, vector<2x32xf32> -> vector<2x32xf32>
    %63 = vector.shape_cast %62 : vector<2x32xf32> to vector<2x1x32xf32>
    %64 = vector.broadcast %63 : vector<2x1x32xf32> to vector<2x8x32xf32>
    %65 = arith.addf %64, %13 : vector<2x8x32xf32>
    %66 = math.tanh %65 : vector<2x8x32xf32>
    %67 = arith.mulf %66, %16 : vector<2x8x32xf32>
    %cst_25 = arith.constant dense<0.000000e+00> : vector<2x8xf32>
    %68 = vector.multi_reduction <add>, %67, %cst_25 [2] : vector<2x8x32xf32> to vector<2x8xf32>
    %69 = vector.shape_cast %68 : vector<2x8xf32> to vector<2x8x1xf32>
    %cst_26 = arith.constant dense<0xFF800000> : vector<2x1xf32>
    %70 = vector.multi_reduction <maximumf>, %69, %cst_26 [1] : vector<2x8x1xf32> to vector<2x1xf32>
    %71 = vector.shape_cast %70 : vector<2x1xf32> to vector<2x1x1xf32>
    %72 = vector.broadcast %71 : vector<2x1x1xf32> to vector<2x8x1xf32>
    %73 = arith.subf %69, %72 : vector<2x8x1xf32>
    %74 = math.exp %73 : vector<2x8x1xf32>
    %cst_27 = arith.constant dense<0.000000e+00> : vector<2x1xf32>
    %75 = vector.multi_reduction <add>, %74, %cst_27 [1] : vector<2x8x1xf32> to vector<2x1xf32>
    %76 = vector.broadcast %74 : vector<2x8x1xf32> to vector<2x8x32xf32>
    %77 = arith.mulf %76, %0 : vector<2x8x32xf32>
    %cst_28 = arith.constant dense<0.000000e+00> : vector<2x32xf32>
    %78 = vector.multi_reduction <add>, %77, %cst_28 [1] : vector<2x8x32xf32> to vector<2x32xf32>
    %79 = tpu.reciprocal %75 {approx = true} : vector<2x1xf32> -> vector<2x1xf32>
    %80 = vector.broadcast %79 : vector<2x1xf32> to vector<2x32xf32>
    %81 = arith.mulf %78, %80 : vector<2x32xf32>
    %cst_29 = arith.constant dense<0.000000e+00> : vector<2x128xf32>
    %82 = tpu.matmul %60, %6, %cst_29 {dimension_numbers = #tpu.dot_dimension_numbers<[1], [0], [0], [1], [0, 0, 1, 1], [], []>} : vector<2x32xf32>, vector<32x128xf32>, vector<2x128xf32> -> vector<2x128xf32>
    %83 = arith.addf %82, %18 : vector<2x128xf32>
    %cst_30 = arith.constant dense<0.000000e+00> : vector<2x128xf32>
    %84 = tpu.matmul %81, %5, %cst_30 {dimension_numbers = #tpu.dot_dimension_numbers<[1], [0], [0], [1], [0, 0, 1, 1], [], []>} : vector<2x32xf32>, vector<32x128xf32>, vector<2x128xf32> -> vector<2x128xf32>
    %85 = arith.addf %84, %83 : vector<2x128xf32>
    %86 = math.tanh %85 : vector<2x128xf32>
    %cst_31 = arith.constant 5.000000e-01 : f32
    %87 = vector.broadcast %cst_31 : f32 to vector<2x128xf32>
    %88 = arith.mulf %87, %86 : vector<2x128xf32>
    %cst_32 = arith.constant 5.000000e-01 : f32
    %89 = vector.broadcast %cst_32 : f32 to vector<2x128xf32>
    %90 = arith.addf %88, %89 : vector<2x128xf32>
    %91 = vector.extract_strided_slice %90 {offsets = [0, 0], sizes = [2, 32], strides = [1, 1]} : vector<2x128xf32> to vector<2x32xf32>
    %92 = vector.extract_strided_slice %90 {offsets = [0, 32], sizes = [2, 32], strides = [1, 1]} : vector<2x128xf32> to vector<2x32xf32>
    %93 = vector.extract_strided_slice %86 {offsets = [0, 64], sizes = [2, 32], strides = [1, 1]} : vector<2x128xf32> to vector<2x32xf32>
    %94 = vector.extract_strided_slice %90 {offsets = [0, 96], sizes = [2, 32], strides = [1, 1]} : vector<2x128xf32> to vector<2x32xf32>
    %95 = arith.mulf %92, %58 : vector<2x32xf32>
    %96 = arith.mulf %91, %93 : vector<2x32xf32>
    %97 = arith.addf %95, %96 : vector<2x32xf32>
    %98 = math.tanh %97 : vector<2x32xf32>
    %99 = arith.mulf %94, %98 : vector<2x32xf32>
    %c2_i32 = arith.constant 2 : i32
    %100 = tpu.concatenate %99, %97 in 1 : vector<2x32xf32>, vector<2x32xf32> -> vector<2x64xf32>
    %cst_33 = arith.constant dense<0.000000e+00> : vector<2x32xf32>
    %101 = tpu.matmul %100, %2, %cst_33 {dimension_numbers = #tpu.dot_dimension_numbers<[1], [0], [0], [1], [0, 0, 1, 1], [], []>} : vector<2x64xf32>, vector<64x32xf32>, vector<2x32xf32> -> vector<2x32xf32>
    %102 = vector.shape_cast %101 : vector<2x32xf32> to vector<2x1x32xf32>
    %103 = vector.broadcast %102 : vector<2x1x32xf32> to vector<2x8x32xf32>
    %104 = arith.addf %103, %13 : vector<2x8x32xf32>
    %105 = math.tanh %104 : vector<2x8x32xf32>
    %106 = arith.mulf %105, %16 : vector<2x8x32xf32>
    %cst_34 = arith.constant dense<0.000000e+00> : vector<2x8xf32>
    %107 = vector.multi_reduction <add>, %106, %cst_34 [2] : vector<2x8x32xf32> to vector<2x8xf32>
    %108 = vector.shape_cast %107 : vector<2x8xf32> to vector<2x8x1xf32>
    %cst_35 = arith.constant dense<0xFF800000> : vector<2x1xf32>
    %109 = vector.multi_reduction <maximumf>, %108, %cst_35 [1] : vector<2x8x1xf32> to vector<2x1xf32>
    %110 = vector.shape_cast %109 : vector<2x1xf32> to vector<2x1x1xf32>
    %111 = vector.broadcast %110 : vector<2x1x1xf32> to vector<2x8x1xf32>
    %112 = arith.subf %108, %111 : vector<2x8x1xf32>
    %113 = math.exp %112 : vector<2x8x1xf32>
    %cst_36 = arith.constant dense<0.000000e+00> : vector<2x1xf32>
    %114 = vector.multi_reduction <add>, %113, %cst_36 [1] : vector<2x8x1xf32> to vector<2x1xf32>
    %115 = vector.broadcast %113 : vector<2x8x1xf32> to vector<2x8x32xf32>
    %116 = arith.mulf %115, %0 : vector<2x8x32xf32>
    %cst_37 = arith.constant dense<0.000000e+00> : vector<2x32xf32>
    %117 = vector.multi_reduction <add>, %116, %cst_37 [1] : vector<2x8x32xf32> to vector<2x32xf32>
    %118 = tpu.reciprocal %114 {approx = true} : vector<2x1xf32> -> vector<2x1xf32>
    %119 = vector.broadcast %118 : vector<2x1xf32> to vector<2x32xf32>
    %120 = arith.mulf %117, %119 : vector<2x32xf32>
    %cst_38 = arith.constant dense<0.000000e+00> : vector<2x128xf32>
    %121 = tpu.matmul %99, %6, %cst_38 {dimension_numbers = #tpu.dot_dimension_numbers<[1], [0], [0], [1], [0, 0, 1, 1], [], []>} : vector<2x32xf32>, vector<32x128xf32>, vector<2x128xf32> -> vector<2x128xf32>
    %122 = arith.addf %121, %18 : vector<2x128xf32>
    %cst_39 = arith.constant dense<0.000000e+00> : vector<2x128xf32>
    %123 = tpu.matmul %120, %5, %cst_39 {dimension_numbers = #tpu.dot_dimension_numbers<[1], [0], [0], [1], [0, 0, 1, 1], [], []>} : vector<2x32xf32>, vector<32x128xf32>, vector<2x128xf32> -> vector<2x128xf32>
    %124 = arith.addf %123, %122 : vector<2x128xf32>
    %125 = math.tanh %124 : vector<2x128xf32>
    %cst_40 = arith.constant 5.000000e-01 : f32
    %126 = vector.broadcast %cst_40 : f32 to vector<2x128xf32>
    %127 = arith.mulf %126, %125 : vector<2x128xf32>
    %cst_41 = arith.constant 5.000000e-01 : f32
    %128 = vector.broadcast %cst_41 : f32 to vector<2x128xf32>
    %129 = arith.addf %127, %128 : vector<2x128xf32>
    %130 = vector.extract_strided_slice %129 {offsets = [0, 0], sizes = [2, 32], strides = [1, 1]} : vector<2x128xf32> to vector<2x32xf32>
    %131 = vector.extract_strided_slice %129 {offsets = [0, 32], sizes = [2, 32], strides = [1, 1]} : vector<2x128xf32> to vector<2x32xf32>
    %132 = vector.extract_strided_slice %125 {offsets = [0, 64], sizes = [2, 32], strides = [1, 1]} : vector<2x128xf32> to vector<2x32xf32>
    %133 = vector.extract_strided_slice %129 {offsets = [0, 96], sizes = [2, 32], strides = [1, 1]} : vector<2x128xf32> to vector<2x32xf32>
    %134 = arith.mulf %131, %97 : vector<2x32xf32>
    %135 = arith.mulf %130, %132 : vector<2x32xf32>
    %136 = arith.addf %134, %135 : vector<2x32xf32>
    %137 = math.tanh %136 : vector<2x32xf32>
    %138 = arith.mulf %133, %137 : vector<2x32xf32>
    %c3_i32 = arith.constant 3 : i32
    %139 = tpu.concatenate %138, %136 in 1 : vector<2x32xf32>, vector<2x32xf32> -> vector<2x64xf32>
    %cst_42 = arith.constant dense<0.000000e+00> : vector<2x32xf32>
    %140 = tpu.matmul %139, %2, %cst_42 {dimension_numbers = #tpu.dot_dimension_numbers<[1], [0], [0], [1], [0, 0, 1, 1], [], []>} : vector<2x64xf32>, vector<64x32xf32>, vector<2x32xf32> -> vector<2x32xf32>
    %141 = vector.shape_cast %140 : vector<2x32xf32> to vector<2x1x32xf32>
    %142 = vector.broadcast %141 : vector<2x1x32xf32> to vector<2x8x32xf32>
    %143 = arith.addf %142, %13 : vector<2x8x32xf32>
    %144 = math.tanh %143 : vector<2x8x32xf32>
    %145 = arith.mulf %144, %16 : vector<2x8x32xf32>
    %cst_43 = arith.constant dense<0.000000e+00> : vector<2x8xf32>
    %146 = vector.multi_reduction <add>, %145, %cst_43 [2] : vector<2x8x32xf32> to vector<2x8xf32>
    %147 = vector.shape_cast %146 : vector<2x8xf32> to vector<2x8x1xf32>
    %cst_44 = arith.constant dense<0xFF800000> : vector<2x1xf32>
    %148 = vector.multi_reduction <maximumf>, %147, %cst_44 [1] : vector<2x8x1xf32> to vector<2x1xf32>
    %149 = vector.shape_cast %148 : vector<2x1xf32> to vector<2x1x1xf32>
    %150 = vector.broadcast %149 : vector<2x1x1xf32> to vector<2x8x1xf32>
    %151 = arith.subf %147, %150 : vector<2x8x1xf32>
    %152 = math.exp %151 : vector<2x8x1xf32>
    %cst_45 = arith.constant dense<0.000000e+00> : vector<2x1xf32>
    %153 = vector.multi_reduction <add>, %152, %cst_45 [1] : vector<2x8x1xf32> to vector<2x1xf32>
    %154 = vector.broadcast %152 : vector<2x8x1xf32> to vector<2x8x32xf32>
    %155 = arith.mulf %154, %0 : vector<2x8x32xf32>
    %cst_46 = arith.constant dense<0.000000e+00> : vector<2x32xf32>
    %156 = vector.multi_reduction <add>, %155, %cst_46 [1] : vector<2x8x32xf32> to vector<2x32xf32>
    %157 = tpu.reciprocal %153 {approx = true} : vector<2x1xf32> -> vector<2x1xf32>
    %158 = vector.broadcast %157 : vector<2x1xf32> to vector<2x32xf32>
    %159 = arith.mulf %156, %158 : vector<2x32xf32>
    %cst_47 = arith.constant dense<0.000000e+00> : vector<2x128xf32>
    %160 = tpu.matmul %138, %6, %cst_47 {dimension_numbers = #tpu.dot_dimension_numbers<[1], [0], [0], [1], [0, 0, 1, 1], [], []>} : vector<2x32xf32>, vector<32x128xf32>, vector<2x128xf32> -> vector<2x128xf32>
    %161 = arith.addf %160, %18 : vector<2x128xf32>
    %cst_48 = arith.constant dense<0.000000e+00> : vector<2x128xf32>
    %162 = tpu.matmul %159, %5, %cst_48 {dimension_numbers = #tpu.dot_dimension_numbers<[1], [0], [0], [1], [0, 0, 1, 1], [], []>} : vector<2x32xf32>, vector<32x128xf32>, vector<2x128xf32> -> vector<2x128xf32>
    %163 = arith.addf %162, %161 : vector<2x128xf32>
    %164 = math.tanh %163 : vector<2x128xf32>
    %cst_49 = arith.constant 5.000000e-01 : f32
    %165 = vector.broadcast %cst_49 : f32 to vector<2x128xf32>
    %166 = arith.mulf %165, %164 : vector<2x128xf32>
    %cst_50 = arith.constant 5.000000e-01 : f32
    %167 = vector.broadcast %cst_50 : f32 to vector<2x128xf32>
    %168 = arith.addf %166, %167 : vector<2x128xf32>
    %169 = vector.extract_strided_slice %168 {offsets = [0, 0], sizes = [2, 32], strides = [1, 1]} : vector<2x128xf32> to vector<2x32xf32>
    %170 = vector.extract_strided_slice %168 {offsets = [0, 32], sizes = [2, 32], strides = [1, 1]} : vector<2x128xf32> to vector<2x32xf32>
    %171 = vector.extract_strided_slice %164 {offsets = [0, 64], sizes = [2, 32], strides = [1, 1]} : vector<2x128xf32> to vector<2x32xf32>
    %172 = vector.extract_strided_slice %168 {offsets = [0, 96], sizes = [2, 32], strides = [1, 1]} : vector<2x128xf32> to vector<2x32xf32>
    %173 = arith.mulf %170, %136 : vector<2x32xf32>
    %174 = arith.mulf %169, %171 : vector<2x32xf32>
    %175 = arith.addf %173, %174 : vector<2x32xf32>
    %176 = math.tanh %175 : vector<2x32xf32>
    %177 = arith.mulf %172, %176 : vector<2x32xf32>
    %c4_i32 = arith.constant 4 : i32
    %178 = tpu.concatenate %177, %175 in 1 : vector<2x32xf32>, vector<2x32xf32> -> vector<2x64xf32>
    %cst_51 = arith.constant dense<0.000000e+00> : vector<2x32xf32>
    %179 = tpu.matmul %178, %2, %cst_51 {dimension_numbers = #tpu.dot_dimension_numbers<[1], [0], [0], [1], [0, 0, 1, 1], [], []>} : vector<2x64xf32>, vector<64x32xf32>, vector<2x32xf32> -> vector<2x32xf32>
    %180 = vector.shape_cast %179 : vector<2x32xf32> to vector<2x1x32xf32>
    %181 = vector.broadcast %180 : vector<2x1x32xf32> to vector<2x8x32xf32>
    %182 = arith.addf %181, %13 : vector<2x8x32xf32>
    %183 = math.tanh %182 : vector<2x8x32xf32>
    %184 = arith.mulf %183, %16 : vector<2x8x32xf32>
    %cst_52 = arith.constant dense<0.000000e+00> : vector<2x8xf32>
    %185 = vector.multi_reduction <add>, %184, %cst_52 [2] : vector<2x8x32xf32> to vector<2x8xf32>
    %186 = vector.shape_cast %185 : vector<2x8xf32> to vector<2x8x1xf32>
    %cst_53 = arith.constant dense<0xFF800000> : vector<2x1xf32>
    %187 = vector.multi_reduction <maximumf>, %186, %cst_53 [1] : vector<2x8x1xf32> to vector<2x1xf32>
    %188 = vector.shape_cast %187 : vector<2x1xf32> to vector<2x1x1xf32>
    %189 = vector.broadcast %188 : vector<2x1x1xf32> to vector<2x8x1xf32>
    %190 = arith.subf %186, %189 : vector<2x8x1xf32>
    %191 = math.exp %190 : vector<2x8x1xf32>
    %cst_54 = arith.constant dense<0.000000e+00> : vector<2x1xf32>
    %192 = vector.multi_reduction <add>, %191, %cst_54 [1] : vector<2x8x1xf32> to vector<2x1xf32>
    %193 = vector.broadcast %191 : vector<2x8x1xf32> to vector<2x8x32xf32>
    %194 = arith.mulf %193, %0 : vector<2x8x32xf32>
    %cst_55 = arith.constant dense<0.000000e+00> : vector<2x32xf32>
    %195 = vector.multi_reduction <add>, %194, %cst_55 [1] : vector<2x8x32xf32> to vector<2x32xf32>
    %196 = tpu.reciprocal %192 {approx = true} : vector<2x1xf32> -> vector<2x1xf32>
    %197 = vector.broadcast %196 : vector<2x1xf32> to vector<2x32xf32>
    %198 = arith.mulf %195, %197 : vector<2x32xf32>
    %cst_56 = arith.constant dense<0.000000e+00> : vector<2x128xf32>
    %199 = tpu.matmul %177, %6, %cst_56 {dimension_numbers = #tpu.dot_dimension_numbers<[1], [0], [0], [1], [0, 0, 1, 1], [], []>} : vector<2x32xf32>, vector<32x128xf32>, vector<2x128xf32> -> vector<2x128xf32>
    %200 = arith.addf %199, %18 : vector<2x128xf32>
    %cst_57 = arith.constant dense<0.000000e+00> : vector<2x128xf32>
    %201 = tpu.matmul %198, %5, %cst_57 {dimension_numbers = #tpu.dot_dimension_numbers<[1], [0], [0], [1], [0, 0, 1, 1], [], []>} : vector<2x32xf32>, vector<32x128xf32>, vector<2x128xf32> -> vector<2x128xf32>
    %202 = arith.addf %201, %200 : vector<2x128xf32>
    %203 = math.tanh %202 : vector<2x128xf32>
    %cst_58 = arith.constant 5.000000e-01 : f32
    %204 = vector.broadcast %cst_58 : f32 to vector<2x128xf32>
    %205 = arith.mulf %204, %203 : vector<2x128xf32>
    %cst_59 = arith.constant 5.000000e-01 : f32
    %206 = vector.broadcast %cst_59 : f32 to vector<2x128xf32>
    %207 = arith.addf %205, %206 : vector<2x128xf32>
    %208 = vector.extract_strided_slice %207 {offsets = [0, 0], sizes = [2, 32], strides = [1, 1]} : vector<2x128xf32> to vector<2x32xf32>
    %209 = vector.extract_strided_slice %207 {offsets = [0, 32], sizes = [2, 32], strides = [1, 1]} : vector<2x128xf32> to vector<2x32xf32>
    %210 = vector.extract_strided_slice %203 {offsets = [0, 64], sizes = [2, 32], strides = [1, 1]} : vector<2x128xf32> to vector<2x32xf32>
    %211 = vector.extract_strided_slice %207 {offsets = [0, 96], sizes = [2, 32], strides = [1, 1]} : vector<2x128xf32> to vector<2x32xf32>
    %212 = arith.mulf %209, %175 : vector<2x32xf32>
    %213 = arith.mulf %208, %210 : vector<2x32xf32>
    %214 = arith.addf %212, %213 : vector<2x32xf32>
    %215 = math.tanh %214 : vector<2x32xf32>
    %216 = arith.mulf %211, %215 : vector<2x32xf32>
    %c5_i32 = arith.constant 5 : i32
    %217 = tpu.concatenate %216, %214 in 1 : vector<2x32xf32>, vector<2x32xf32> -> vector<2x64xf32>
    %cst_60 = arith.constant dense<0.000000e+00> : vector<2x32xf32>
    %218 = tpu.matmul %217, %2, %cst_60 {dimension_numbers = #tpu.dot_dimension_numbers<[1], [0], [0], [1], [0, 0, 1, 1], [], []>} : vector<2x64xf32>, vector<64x32xf32>, vector<2x32xf32> -> vector<2x32xf32>
    %219 = vector.shape_cast %218 : vector<2x32xf32> to vector<2x1x32xf32>
    %220 = vector.broadcast %219 : vector<2x1x32xf32> to vector<2x8x32xf32>
    %221 = arith.addf %220, %13 : vector<2x8x32xf32>
    %222 = math.tanh %221 : vector<2x8x32xf32>
    %223 = arith.mulf %222, %16 : vector<2x8x32xf32>
    %cst_61 = arith.constant dense<0.000000e+00> : vector<2x8xf32>
    %224 = vector.multi_reduction <add>, %223, %cst_61 [2] : vector<2x8x32xf32> to vector<2x8xf32>
    %225 = vector.shape_cast %224 : vector<2x8xf32> to vector<2x8x1xf32>
    %cst_62 = arith.constant dense<0xFF800000> : vector<2x1xf32>
    %226 = vector.multi_reduction <maximumf>, %225, %cst_62 [1] : vector<2x8x1xf32> to vector<2x1xf32>
    %227 = vector.shape_cast %226 : vector<2x1xf32> to vector<2x1x1xf32>
    %228 = vector.broadcast %227 : vector<2x1x1xf32> to vector<2x8x1xf32>
    %229 = arith.subf %225, %228 : vector<2x8x1xf32>
    %230 = math.exp %229 : vector<2x8x1xf32>
    %cst_63 = arith.constant dense<0.000000e+00> : vector<2x1xf32>
    %231 = vector.multi_reduction <add>, %230, %cst_63 [1] : vector<2x8x1xf32> to vector<2x1xf32>
    %232 = vector.broadcast %230 : vector<2x8x1xf32> to vector<2x8x32xf32>
    %233 = arith.mulf %232, %0 : vector<2x8x32xf32>
    %cst_64 = arith.constant dense<0.000000e+00> : vector<2x32xf32>
    %234 = vector.multi_reduction <add>, %233, %cst_64 [1] : vector<2x8x32xf32> to vector<2x32xf32>
    %235 = tpu.reciprocal %231 {approx = true} : vector<2x1xf32> -> vector<2x1xf32>
    %236 = vector.broadcast %235 : vector<2x1xf32> to vector<2x32xf32>
    %237 = arith.mulf %234, %236 : vector<2x32xf32>
    %cst_65 = arith.constant dense<0.000000e+00> : vector<2x128xf32>
    %238 = tpu.matmul %216, %6, %cst_65 {dimension_numbers = #tpu.dot_dimension_numbers<[1], [0], [0], [1], [0, 0, 1, 1], [], []>} : vector<2x32xf32>, vector<32x128xf32>, vector<2x128xf32> -> vector<2x128xf32>
    %239 = arith.addf %238, %18 : vector<2x128xf32>
    %cst_66 = arith.constant dense<0.000000e+00> : vector<2x128xf32>
    %240 = tpu.matmul %237, %5, %cst_66 {dimension_numbers = #tpu.dot_dimension_numbers<[1], [0], [0], [1], [0, 0, 1, 1], [], []>} : vector<2x32xf32>, vector<32x128xf32>, vector<2x128xf32> -> vector<2x128xf32>
    %241 = arith.addf %240, %239 : vector<2x128xf32>
    %242 = math.tanh %241 : vector<2x128xf32>
    %cst_67 = arith.constant 5.000000e-01 : f32
    %243 = vector.broadcast %cst_67 : f32 to vector<2x128xf32>
    %244 = arith.mulf %243, %242 : vector<2x128xf32>
    %cst_68 = arith.constant 5.000000e-01 : f32
    %245 = vector.broadcast %cst_68 : f32 to vector<2x128xf32>
    %246 = arith.addf %244, %245 : vector<2x128xf32>
    %247 = vector.extract_strided_slice %246 {offsets = [0, 0], sizes = [2, 32], strides = [1, 1]} : vector<2x128xf32> to vector<2x32xf32>
    %248 = vector.extract_strided_slice %246 {offsets = [0, 32], sizes = [2, 32], strides = [1, 1]} : vector<2x128xf32> to vector<2x32xf32>
    %249 = vector.extract_strided_slice %242 {offsets = [0, 64], sizes = [2, 32], strides = [1, 1]} : vector<2x128xf32> to vector<2x32xf32>
    %250 = vector.extract_strided_slice %246 {offsets = [0, 96], sizes = [2, 32], strides = [1, 1]} : vector<2x128xf32> to vector<2x32xf32>
    %251 = arith.mulf %248, %214 : vector<2x32xf32>
    %252 = arith.mulf %247, %249 : vector<2x32xf32>
    %253 = arith.addf %251, %252 : vector<2x32xf32>
    %254 = math.tanh %253 : vector<2x32xf32>
    %255 = arith.mulf %250, %254 : vector<2x32xf32>
    %c6_i32 = arith.constant 6 : i32
    %256 = tpu.concatenate %255, %253 in 1 : vector<2x32xf32>, vector<2x32xf32> -> vector<2x64xf32>
    %cst_69 = arith.constant dense<0.000000e+00> : vector<2x32xf32>
    %257 = tpu.matmul %256, %2, %cst_69 {dimension_numbers = #tpu.dot_dimension_numbers<[1], [0], [0], [1], [0, 0, 1, 1], [], []>} : vector<2x64xf32>, vector<64x32xf32>, vector<2x32xf32> -> vector<2x32xf32>
    %258 = vector.shape_cast %257 : vector<2x32xf32> to vector<2x1x32xf32>
    %259 = vector.broadcast %258 : vector<2x1x32xf32> to vector<2x8x32xf32>
    %260 = arith.addf %259, %13 : vector<2x8x32xf32>
    %261 = math.tanh %260 : vector<2x8x32xf32>
    %262 = arith.mulf %261, %16 : vector<2x8x32xf32>
    %cst_70 = arith.constant dense<0.000000e+00> : vector<2x8xf32>
    %263 = vector.multi_reduction <add>, %262, %cst_70 [2] : vector<2x8x32xf32> to vector<2x8xf32>
    %264 = vector.shape_cast %263 : vector<2x8xf32> to vector<2x8x1xf32>
    %cst_71 = arith.constant dense<0xFF800000> : vector<2x1xf32>
    %265 = vector.multi_reduction <maximumf>, %264, %cst_71 [1] : vector<2x8x1xf32> to vector<2x1xf32>
    %266 = vector.shape_cast %265 : vector<2x1xf32> to vector<2x1x1xf32>
    %267 = vector.broadcast %266 : vector<2x1x1xf32> to vector<2x8x1xf32>
    %268 = arith.subf %264, %267 : vector<2x8x1xf32>
    %269 = math.exp %268 : vector<2x8x1xf32>
    %cst_72 = arith.constant dense<0.000000e+00> : vector<2x1xf32>
    %270 = vector.multi_reduction <add>, %269, %cst_72 [1] : vector<2x8x1xf32> to vector<2x1xf32>
    %271 = vector.broadcast %269 : vector<2x8x1xf32> to vector<2x8x32xf32>
    %272 = arith.mulf %271, %0 : vector<2x8x32xf32>
    %cst_73 = arith.constant dense<0.000000e+00> : vector<2x32xf32>
    %273 = vector.multi_reduction <add>, %272, %cst_73 [1] : vector<2x8x32xf32> to vector<2x32xf32>
    %274 = tpu.reciprocal %270 {approx = true} : vector<2x1xf32> -> vector<2x1xf32>
    %275 = vector.broadcast %274 : vector<2x1xf32> to vector<2x32xf32>
    %276 = arith.mulf %273, %275 : vector<2x32xf32>
    %cst_74 = arith.constant dense<0.000000e+00> : vector<2x128xf32>
    %277 = tpu.matmul %255, %6, %cst_74 {dimension_numbers = #tpu.dot_dimension_numbers<[1], [0], [0], [1], [0, 0, 1, 1], [], []>} : vector<2x32xf32>, vector<32x128xf32>, vector<2x128xf32> -> vector<2x128xf32>
    %278 = arith.addf %277, %18 : vector<2x128xf32>
    %cst_75 = arith.constant dense<0.000000e+00> : vector<2x128xf32>
    %279 = tpu.matmul %276, %5, %cst_75 {dimension_numbers = #tpu.dot_dimension_numbers<[1], [0], [0], [1], [0, 0, 1, 1], [], []>} : vector<2x32xf32>, vector<32x128xf32>, vector<2x128xf32> -> vector<2x128xf32>
    %280 = arith.addf %279, %278 : vector<2x128xf32>
    %281 = math.tanh %280 : vector<2x128xf32>
    %cst_76 = arith.constant 5.000000e-01 : f32
    %282 = vector.broadcast %cst_76 : f32 to vector<2x128xf32>
    %283 = arith.mulf %282, %281 : vector<2x128xf32>
    %cst_77 = arith.constant 5.000000e-01 : f32
    %284 = vector.broadcast %cst_77 : f32 to vector<2x128xf32>
    %285 = arith.addf %283, %284 : vector<2x128xf32>
    %286 = vector.extract_strided_slice %285 {offsets = [0, 0], sizes = [2, 32], strides = [1, 1]} : vector<2x128xf32> to vector<2x32xf32>
    %287 = vector.extract_strided_slice %285 {offsets = [0, 32], sizes = [2, 32], strides = [1, 1]} : vector<2x128xf32> to vector<2x32xf32>
    %288 = vector.extract_strided_slice %281 {offsets = [0, 64], sizes = [2, 32], strides = [1, 1]} : vector<2x128xf32> to vector<2x32xf32>
    %289 = vector.extract_strided_slice %285 {offsets = [0, 96], sizes = [2, 32], strides = [1, 1]} : vector<2x128xf32> to vector<2x32xf32>
    %290 = arith.mulf %287, %253 : vector<2x32xf32>
    %291 = arith.mulf %286, %288 : vector<2x32xf32>
    %292 = arith.addf %290, %291 : vector<2x32xf32>
    %293 = math.tanh %292 : vector<2x32xf32>
    %294 = arith.mulf %289, %293 : vector<2x32xf32>
    %c7_i32 = arith.constant 7 : i32
    %295 = tpu.concatenate %294, %292 in 1 : vector<2x32xf32>, vector<2x32xf32> -> vector<2x64xf32>
    %cst_78 = arith.constant dense<0.000000e+00> : vector<2x32xf32>
    %296 = tpu.matmul %295, %2, %cst_78 {dimension_numbers = #tpu.dot_dimension_numbers<[1], [0], [0], [1], [0, 0, 1, 1], [], []>} : vector<2x64xf32>, vector<64x32xf32>, vector<2x32xf32> -> vector<2x32xf32>
    %297 = vector.shape_cast %296 : vector<2x32xf32> to vector<2x1x32xf32>
    %298 = vector.broadcast %297 : vector<2x1x32xf32> to vector<2x8x32xf32>
    %299 = arith.addf %298, %13 : vector<2x8x32xf32>
    %300 = math.tanh %299 : vector<2x8x32xf32>
    %301 = arith.mulf %300, %16 : vector<2x8x32xf32>
    %cst_79 = arith.constant dense<0.000000e+00> : vector<2x8xf32>
    %302 = vector.multi_reduction <add>, %301, %cst_79 [2] : vector<2x8x32xf32> to vector<2x8xf32>
    %303 = vector.shape_cast %302 : vector<2x8xf32> to vector<2x8x1xf32>
    %cst_80 = arith.constant dense<0xFF800000> : vector<2x1xf32>
    %304 = vector.multi_reduction <maximumf>, %303, %cst_80 [1] : vector<2x8x1xf32> to vector<2x1xf32>
    %305 = vector.shape_cast %304 : vector<2x1xf32> to vector<2x1x1xf32>
    %306 = vector.broadcast %305 : vector<2x1x1xf32> to vector<2x8x1xf32>
    %307 = arith.subf %303, %306 : vector<2x8x1xf32>
    %308 = math.exp %307 : vector<2x8x1xf32>
    %cst_81 = arith.constant dense<0.000000e+00> : vector<2x1xf32>
    %309 = vector.multi_reduction <add>, %308, %cst_81 [1] : vector<2x8x1xf32> to vector<2x1xf32>
    %310 = vector.broadcast %308 : vector<2x8x1xf32> to vector<2x8x32xf32>
    %311 = arith.mulf %310, %0 : vector<2x8x32xf32>
    %cst_82 = arith.constant dense<0.000000e+00> : vector<2x32xf32>
    %312 = vector.multi_reduction <add>, %311, %cst_82 [1] : vector<2x8x32xf32> to vector<2x32xf32>
    %313 = tpu.reciprocal %309 {approx = true} : vector<2x1xf32> -> vector<2x1xf32>
    %314 = vector.broadcast %313 : vector<2x1xf32> to vector<2x32xf32>
    %315 = arith.mulf %312, %314 : vector<2x32xf32>
    %cst_83 = arith.constant dense<0.000000e+00> : vector<2x128xf32>
    %316 = tpu.matmul %294, %6, %cst_83 {dimension_numbers = #tpu.dot_dimension_numbers<[1], [0], [0], [1], [0, 0, 1, 1], [], []>} : vector<2x32xf32>, vector<32x128xf32>, vector<2x128xf32> -> vector<2x128xf32>
    %317 = arith.addf %316, %18 : vector<2x128xf32>
    %cst_84 = arith.constant dense<0.000000e+00> : vector<2x128xf32>
    %318 = tpu.matmul %315, %5, %cst_84 {dimension_numbers = #tpu.dot_dimension_numbers<[1], [0], [0], [1], [0, 0, 1, 1], [], []>} : vector<2x32xf32>, vector<32x128xf32>, vector<2x128xf32> -> vector<2x128xf32>
    %319 = arith.addf %318, %317 : vector<2x128xf32>
    %320 = math.tanh %319 : vector<2x128xf32>
    %cst_85 = arith.constant 5.000000e-01 : f32
    %321 = vector.broadcast %cst_85 : f32 to vector<2x128xf32>
    %322 = arith.mulf %321, %320 : vector<2x128xf32>
    %cst_86 = arith.constant 5.000000e-01 : f32
    %323 = vector.broadcast %cst_86 : f32 to vector<2x128xf32>
    %324 = arith.addf %322, %323 : vector<2x128xf32>
    %325 = vector.extract_strided_slice %324 {offsets = [0, 0], sizes = [2, 32], strides = [1, 1]} : vector<2x128xf32> to vector<2x32xf32>
    %326 = vector.extract_strided_slice %324 {offsets = [0, 32], sizes = [2, 32], strides = [1, 1]} : vector<2x128xf32> to vector<2x32xf32>
    %327 = vector.extract_strided_slice %320 {offsets = [0, 64], sizes = [2, 32], strides = [1, 1]} : vector<2x128xf32> to vector<2x32xf32>
    %328 = vector.extract_strided_slice %324 {offsets = [0, 96], sizes = [2, 32], strides = [1, 1]} : vector<2x128xf32> to vector<2x32xf32>
    %329 = arith.mulf %326, %292 : vector<2x32xf32>
    %330 = arith.mulf %325, %327 : vector<2x32xf32>
    %331 = arith.addf %329, %330 : vector<2x32xf32>
    %332 = math.tanh %331 : vector<2x32xf32>
    %333 = arith.mulf %328, %332 : vector<2x32xf32>
    %334 = tpu.concatenate %333, %315 in 1 : vector<2x32xf32>, vector<2x32xf32> -> vector<2x64xf32>
    %c0_87 = arith.constant 0 : index
    %c0_88 = arith.constant 0 : index
    %335 = vector.load %arg3[%c0_87, %c0_88] : memref<64x1xf32, #tpu.memory_space<vmem>>, vector<64x1xf32>
    %cst_89 = arith.constant dense<0.000000e+00> : vector<2x1xf32>
    %336 = tpu.matmul %334, %335, %cst_89 {dimension_numbers = #tpu.dot_dimension_numbers<[1], [0], [0], [1], [0, 0, 1, 1], [], []>} : vector<2x64xf32>, vector<64x1xf32>, vector<2x1xf32> -> vector<2x1xf32>
    %c0_90 = arith.constant 0 : index
    %337 = memref.load %arg4[%c0_90] : memref<1xf32, #tpu.memory_space<smem>>
    %338 = vector.broadcast %337 : f32 to vector<2x1xf32>
    %339 = arith.addf %336, %338 : vector<2x1xf32>
    %c0_91 = arith.constant 0 : index
    %c0_92 = arith.constant 0 : index
    %340 = vector.load %arg5[%c0_91, %c0_92] : memref<2x1xf32, #tpu.memory_space<vmem>>, vector<2x1xf32>
    tpu.vector_store %arg5[%c0_91, %c0_92], %339 {strides = array<i32>} : memref<2x1xf32, #tpu.memory_space<vmem>>, vector<2x1xf32>,
    return
  }
}

</mosaic_0001>

<llo_original>
// kernel: tpu_custom_call.1
$region0: #{tpu_custom_call.1}
  #allocation0 [shape = 'u32[]', space=smem, size = 0x4, offset = 0x4, fixed_abs, tag = 'smem constant byte address 0x4 - core index']
  #allocation1 [shape = 'u32[72,128]{1,0:T(1,128)}', space=vmem, size = 0x9000, scoped, tag = 'internal scratch']
  #allocation2 [shape = 'f32[1]{0:T(128)S(6)}', space=smem, size = 0x200, scoped, tag = 'scoped memory for tpu_custom_call.1']
  %s0 = inlined_call_operand.vmem [shape: f32[2,8,32], index: 0, kind: input, shape index: {}]
  %s1 = inlined_call_operand.vmem [shape: f32[98,32], index: 1, kind: input, shape index: {}]
  %s2 = inlined_call_operand.vmem [shape: f32[65,128], index: 2, kind: input, shape index: {}]
  %s3 = inlined_call_operand.vmem [shape: f32[64,1], index: 3, kind: input, shape index: {}]
  %s4 = inlined_call_operand.<no memory space> [shape: f32[1], index: 4, kind: input, shape index: {}]
  %s5 = inlined_call_operand.vmem [shape: f32[2,1], index: 5, kind: output, shape index: {}]
  %s6 = sld [smem:[#allocation0]]
  $region30: #{tpu_custom_call.1} parent=0
    _
  %s8 = ssub.s32 1, %s6
  %s9 = scalar_select 0, %s8, %s6
  %10 = sst [smem:[#allocation2]] %s4
  // Predicated region
  $region2: #{tpu_custom_call.1} parent=0 // pred_check
    _
  $region3: #{tpu_custom_call.1} parent=0 // pred_check_branch
    %12 = sbr.rel (0) target = $region5
  $region4: #{tpu_custom_call.1} parent=0 // pred_region
    _
  $region5: #{tpu_custom_call.1} parent=0 // pred_fallthru
    _
  // Predicated region
  $region6: #{tpu_custom_call.1} parent=0 // pred_check
    _
  $region7: #{tpu_custom_call.1} parent=0 // pred_check_branch
    %14 = sbr.rel (0) target = $region9
  $region8: #{tpu_custom_call.1} parent=0 // pred_region
    _
  $region9: #{tpu_custom_call.1} parent=0 // pred_fallthru
    _
  // Predicated region
  $region10: #{tpu_custom_call.1} parent=0 // pred_check
    _
  $region11: #{tpu_custom_call.1} parent=0 // pred_check_branch
    %16 = sbr.rel (0) target = $region13
  $region12: #{tpu_custom_call.1} parent=0 // pred_region
    _
  $region13: #{tpu_custom_call.1} parent=0 // pred_fallthru
    _
  // Predicated region
  $region14: #{tpu_custom_call.1} parent=0 // pred_check
    _
  $region15: #{tpu_custom_call.1} parent=0 // pred_check_branch
    %18 = sbr.rel (0) target = $region17
  $region16: #{tpu_custom_call.1} parent=0 // pred_region
    _
  $region17: #{tpu_custom_call.1} parent=0 // pred_fallthru
    _
  // Predicated region
  $region18: #{tpu_custom_call.1} parent=0 // pred_check
    _
  $region19: #{tpu_custom_call.1} parent=0 // pred_check_branch
    %20 = sbr.rel (0) target = $region21
  $region20: #{tpu_custom_call.1} parent=0 // pred_region
    _
  $region21: #{tpu_custom_call.1} parent=0 // pred_fallthru
    _
  %v21 = vld [vmem:[%s0] sm:$0xff]
  %v22 = vld [vmem:[%s0 + $0x8] sm:$0xff]
  %v23 = vld [vmem:[%s1] sm:$0xff]
  %v24 = vld [vmem:[%s1 + $0x8] sm:$0xff]
  %v25 = vld [vmem:[%s1 + $0x10] sm:$0xff]
  %v26 = vld [vmem:[%s1 + $0x18] sm:$0xff]
  %v27 = vld [vmem:[%s1 + $0x20] sm:$0xff]
  %v28 = vld [vmem:[%s1 + $0x28] sm:$0xff]
  %v29 = vld [vmem:[%s1 + $0x30] sm:$0xff]
  %v30 = vld [vmem:[%s1 + $0x38] sm:$0xff]
  %v31 = vld [vmem:[%s1 + $0x40] sm:$0xff]
  %v32 = vld [vmem:[%s1 + $0x48] sm:$0xff]
  %v33 = vld [vmem:[%s1 + $0x50] sm:$0xff]
  %v34 = vld [vmem:[%s1 + $0x58] sm:$0xff]
  %v35 = vld [vmem:[%s1 + $0x60] sm:$0x1]
  %v36 = vld [vmem:[%s1 + $0x61] sm:$0x1]
  %v37 = vld [vmem:[%s2] sm:$0xff]
  %v38 = vld [vmem:[%s2 + $0x8] sm:$0xff]
  %v39 = vld [vmem:[%s2 + $0x10] sm:$0xff]
  %v40 = vld [vmem:[%s2 + $0x18] sm:$0xff]
  %v41 = vld [vmem:[%s2 + $0x20] sm:$0xff]
  %v42 = vld [vmem:[%s2 + $0x28] sm:$0xff]
  %v43 = vld [vmem:[%s2 + $0x30] sm:$0xff]
  %v44 = vld [vmem:[%s2 + $0x38] sm:$0xff]
  %v45 = vld [vmem:[%s2 + $0x40] sm:$0x1]
  %vm46 = vcmask 261120
  %v48 = vsel %vm46, %v21, 0
  %v51 = vsel %vm46, %v22, 0
  %53 = vmatpush.msra.mxu0 0.0
  %54 = vmatpush.msra.mxu0 0.0
  %55 = vmatpush.msra.mxu0 0.0
  %56 = vmatpush.msra.mxu0 0.0
  %57 = vmatpush.msra.mxu0 0.0
  %58 = vmatpush.msra.mxu0 0.0
  %59 = vmatpush.msra.mxu0 0.0
  %60 = vmatpush.msra.mxu0 0.0
  %61 = vmatpush.msra.mxu0 0.0
  %62 = vmatpush.msra.mxu0 0.0
  %63 = vmatpush.msra.mxu0 0.0
  %64 = vmatpush.msra.mxu0 0.0
  %65 = vmatpush.msra.mxu0 %v26
  %66 = vmatpush.msra.mxu0 %v25
  %67 = vmatpush.msra.mxu0 %v24
  %68 = vmatpush.msra.mxu0 %v23
  %69 = vmatmul.f32.gmra.mxu0 %v48
  %v70 = vpop.f32.mrf.mxu0
  %v71 = vadd.f32 0.0, %v70
  %72 = vmatmul.f32.gmra.mxu0 %v51
  %v73 = vpop.f32.mrf.mxu0
  %v74 = vadd.f32 0.0, %v73
  %75 = vdwg.mxu0
  %v76 = vperm.slane %v35, 0
  %v77 = vadd.f32 %v71, %v76
  %v78 = vadd.f32 %v74, %v76
  %v79 = vperm.slane %v36, 0
  %v80 = vperm.slane %v45, 0
  %vm81 = vcmask 523264
  %v83 = vsel %vm81, 0.0, 0
  %85 = vmatpush.msra.mxu0 0.0
  %86 = vmatpush.msra.mxu0 0.0
  %87 = vmatpush.msra.mxu0 0.0
  %88 = vmatpush.msra.mxu0 0.0
  %89 = vmatpush.msra.mxu0 0.0
  %90 = vmatpush.msra.mxu0 0.0
  %91 = vmatpush.msra.mxu0 0.0
  %92 = vmatpush.msra.mxu0 0.0
  %93 = vmatpush.msra.mxu0 %v34
  %94 = vmatpush.msra.mxu0 %v33
  %95 = vmatpush.msra.mxu0 %v32
  %96 = vmatpush.msra.mxu0 %v31
  %97 = vmatpush.msra.mxu0 %v30
  %98 = vmatpush.msra.mxu0 %v29
  %99 = vmatpush.msra.mxu0 %v28
  %100 = vmatpush.msra.mxu0 %v27
  %101 = vmatmul.f32.gmra.mxu0 %v83
  %v102 = vpop.f32.mrf.mxu0
  %v103 = vadd.f32 0.0, %v102
  %104 = vdwg.mxu0
  %v106 = vrot.slane %v103, 1
  %v107 = vperm.slane %v103, 0
  %v108 = vperm.slane %v106, 0
  %v111 = vadd.f32 %v107, %v77
  %v112 = vadd.f32 %v108, %v78
  %v113 = vtanh.pop %v111
  %v114 = vtanh.pop %v112
  %v115 = vmul.f32 %v113, %v79
  %v116 = vmul.f32 %v114, %v79
  %v117 = vsel %vm46, %v115, 0.0
  %118 = vadd.xlane.f32.xlu0 %v117
  %v119 = vpop.xlane.xlu0 %118
  %v120 = vsel %vm46, %v116, 0.0
  %121 = vadd.xlane.f32.xlu0 %v120
  %v122 = vpop.xlane.xlu0 %121
  %v123 = vrot.slane %v119, 4
  %v124 = vmax.f32 %v119, %v123
  %v125 = vrot.slane %v124, 2
  %v126 = vmax.f32 %v124, %v125
  %v127 = vrot.slane %v126, 1
  %v128 = vmax.f32 %v126, %v127
  %v129 = vrot.slane %v122, 4
  %v130 = vmax.f32 %v122, %v129
  %v131 = vrot.slane %v130, 2
  %v132 = vmax.f32 %v130, %v131
  %v133 = vrot.slane %v132, 1
  %v134 = vmax.f32 %v132, %v133
  %v135 = vsub.f32 %v119, %v128
  %v136 = vsub.f32 %v122, %v134
  %v137 = vmul.f32 %v135, 1.442695
  %v138 = vpow.pop %v137
  %v139 = vmul.f32 %v136, 1.442695
  %v140 = vpow.pop %v139
  %v141 = vrot.slane %v138, 4
  %v142 = vadd.f32 %v138, %v141
  %v143 = vrot.slane %v142, 2
  %v144 = vadd.f32 %v142, %v143
  %v145 = vrot.slane %v144, 1
  %v146 = vadd.f32 %v144, %v145
  %v147 = vrot.slane %v140, 4
  %v148 = vadd.f32 %v140, %v147
  %v149 = vrot.slane %v148, 2
  %v150 = vadd.f32 %v148, %v149
  %v151 = vrot.slane %v150, 1
  %v152 = vadd.f32 %v150, %v151
  %v153 = vmul.f32 %v138, %v21
  %v154 = vmul.f32 %v140, %v22
  %v155 = vsel %vm46, %v153, 0.0
  %v156 = vrot.slane %v155, 4
  %v157 = vadd.f32 %v155, %v156
  %v158 = vrot.slane %v157, 2
  %v159 = vadd.f32 %v157, %v158
  %v160 = vrot.slane %v159, 1
  %v161 = vadd.f32 %v159, %v160
  %v162 = vsel %vm46, %v154, 0.0
  %v163 = vrot.slane %v162, 4
  %v164 = vadd.f32 %v162, %v163
  %v165 = vrot.slane %v164, 2
  %v166 = vadd.f32 %v164, %v165
  %v167 = vrot.slane %v166, 1
  %v168 = vadd.f32 %v166, %v167
  %v169 = vrcp.pop %v146
  %v170 = vrcp.pop %v152
  %v171 = vmul.f32 %v161, %v169
  %v172 = vmul.f32 %v168, %v170
  %v173 = vsel %vm46, 0.0, 0
  %175 = vmatpush.msra.mxu0 0.0
  %176 = vmatpush.msra.mxu0 0.0
  %177 = vmatpush.msra.mxu0 0.0
  %178 = vmatpush.msra.mxu0 0.0
  %179 = vmatpush.msra.mxu0 0.0
  %180 = vmatpush.msra.mxu0 0.0
  %181 = vmatpush.msra.mxu0 0.0
  %182 = vmatpush.msra.mxu0 0.0
  %183 = vmatpush.msra.mxu0 0.0
  %184 = vmatpush.msra.mxu0 0.0
  %185 = vmatpush.msra.mxu0 0.0
  %186 = vmatpush.msra.mxu0 0.0
  %187 = vmatpush.msra.mxu0 %v44
  %188 = vmatpush.msra.mxu0 %v43
  %189 = vmatpush.msra.mxu0 %v42
  %190 = vmatpush.msra.mxu0 %v41
  %191 = vmatmul.f32.gmra.mxu0 %v173
  %v192 = vpop.f32.mrf.mxu0
  %v193 = vadd.f32 %v80, %v192
  %194 = vdwg.mxu0
  %vm197 = vcmask 1041409
  %v198 = vsel %vm197, %v172, %v171
  %v199 = vsel %vm46, %v198, 0
  %201 = vmatpush.msra.mxu0 0.0
  %202 = vmatpush.msra.mxu0 0.0
  %203 = vmatpush.msra.mxu0 0.0
  %204 = vmatpush.msra.mxu0 0.0
  %205 = vmatpush.msra.mxu0 0.0
  %206 = vmatpush.msra.mxu0 0.0
  %207 = vmatpush.msra.mxu0 0.0
  %208 = vmatpush.msra.mxu0 0.0
  %209 = vmatpush.msra.mxu0 0.0
  %210 = vmatpush.msra.mxu0 0.0
  %211 = vmatpush.msra.mxu0 0.0
  %212 = vmatpush.msra.mxu0 0.0
  %213 = vmatpush.msra.mxu0 %v40
  %214 = vmatpush.msra.mxu0 %v39
  %215 = vmatpush.msra.mxu0 %v38
  %216 = vmatpush.msra.mxu0 %v37
  %217 = vmatmul.f32.gmra.mxu0 %v199
  %v218 = vpop.f32.mrf.mxu0
  %v219 = vadd.f32 %v193, %v218
  %220 = vdwg.mxu0
  %v221 = vtanh.pop %v219
  %v222 = vmul.f32 %v221, 0.5
  %v223 = vadd.f32 %v222, 0.5
  %v224 = vmul.f32 %v223, 0.0
  %226 = vrot.lane.b32.xlu0 %v221, 64
  %v227 = vpop.permute.xlu0 %226
  %v229 = vmul.f32 %v223, %v227
  %231 = vrot.lane.b32.xlu0 %v229, 32
  %v232 = vpop.permute.xlu0 %231
  %v234 = vadd.f32 %v224, %v232
  %v235 = vtanh.pop %v234
  %237 = vrot.lane.b32.xlu0 %v235, 64
  %v238 = vpop.permute.xlu0 %237
  %v240 = vmul.f32 %v223, %v238
  %242 = vrot.lane.b32.xlu0 %v240, 32
  %v243 = vpop.permute.xlu0 %242
  %v245 = vsel %vm46, %v243, %v234
  %v247 = vsel %vm81, %v245, 0
  %249 = vmatpush.msra.mxu0 0.0
  %250 = vmatpush.msra.mxu0 0.0
  %251 = vmatpush.msra.mxu0 0.0
  %252 = vmatpush.msra.mxu0 0.0
  %253 = vmatpush.msra.mxu0 0.0
  %254 = vmatpush.msra.mxu0 0.0
  %255 = vmatpush.msra.mxu0 0.0
  %256 = vmatpush.msra.mxu0 0.0
  %257 = vmatpush.msra.mxu0 %v34
  %258 = vmatpush.msra.mxu0 %v33
  %259 = vmatpush.msra.mxu0 %v32
  %260 = vmatpush.msra.mxu0 %v31
  %261 = vmatpush.msra.mxu0 %v30
  %262 = vmatpush.msra.mxu0 %v29
  %263 = vmatpush.msra.mxu0 %v28
  %264 = vmatpush.msra.mxu0 %v27
  %265 = vmatmul.f32.gmra.mxu0 %v247
  %v266 = vpop.f32.mrf.mxu0
  %v267 = vadd.f32 0.0, %v266
  %268 = vdwg.mxu0
  %v270 = vrot.slane %v267, 1
  %v271 = vperm.slane %v267, 0
  %v272 = vperm.slane %v270, 0
  %v275 = vadd.f32 %v271, %v77
  %v276 = vadd.f32 %v272, %v78
  %v277 = vtanh.pop %v275
  %v278 = vtanh.pop %v276
  %v279 = vmul.f32 %v277, %v79
  %v280 = vmul.f32 %v278, %v79
  %v281 = vsel %vm46, %v279, 0.0
  %282 = vadd.xlane.f32.xlu0 %v281
  %v283 = vpop.xlane.xlu0 %282
  %v284 = vsel %vm46, %v280, 0.0
  %285 = vadd.xlane.f32.xlu0 %v284
  %v286 = vpop.xlane.xlu0 %285
  %v287 = vrot.slane %v283, 4
  %v288 = vmax.f32 %v283, %v287
  %v289 = vrot.slane %v288, 2
  %v290 = vmax.f32 %v288, %v289
  %v291 = vrot.slane %v290, 1
  %v292 = vmax.f32 %v290, %v291
  %v293 = vrot.slane %v286, 4
  %v294 = vmax.f32 %v286, %v293
  %v295 = vrot.slane %v294, 2
  %v296 = vmax.f32 %v294, %v295
  %v297 = vrot.slane %v296, 1
  %v298 = vmax.f32 %v296, %v297
  %v299 = vsub.f32 %v283, %v292
  %v300 = vsub.f32 %v286, %v298
  %v301 = vmul.f32 %v299, 1.442695
  %v302 = vpow.pop %v301
  %v303 = vmul.f32 %v300, 1.442695
  %v304 = vpow.pop %v303
  %v305 = vrot.slane %v302, 4
  %v306 = vadd.f32 %v302, %v305
  %v307 = vrot.slane %v306, 2
  %v308 = vadd.f32 %v306, %v307
  %v309 = vrot.slane %v308, 1
  %v310 = vadd.f32 %v308, %v309
  %v311 = vrot.slane %v304, 4
  %v312 = vadd.f32 %v304, %v311
  %v313 = vrot.slane %v312, 2
  %v314 = vadd.f32 %v312, %v313
  %v315 = vrot.slane %v314, 1
  %v316 = vadd.f32 %v314, %v315
  %v317 = vmul.f32 %v302, %v21
  %v318 = vmul.f32 %v304, %v22
  %v319 = vsel %vm46, %v317, 0.0
  %v320 = vrot.slane %v319, 4
  %v321 = vadd.f32 %v319, %v320
  %v322 = vrot.slane %v321, 2
  %v323 = vadd.f32 %v321, %v322
  %v324 = vrot.slane %v323, 1
  %v325 = vadd.f32 %v323, %v324
  %v326 = vsel %vm46, %v318, 0.0
  %v327 = vrot.slane %v326, 4
  %v328 = vadd.f32 %v326, %v327
  %v329 = vrot.slane %v328, 2
  %v330 = vadd.f32 %v328, %v329
  %v331 = vrot.slane %v330, 1
  %v332 = vadd.f32 %v330, %v331
  %v333 = vrcp.pop %v310
  %v334 = vrcp.pop %v316
  %v335 = vmul.f32 %v325, %v333
  %v336 = vmul.f32 %v332, %v334
  %v337 = vsel %vm46, %v243, 0
  %339 = vmatpush.msra.mxu0 0.0
  %340 = vmatpush.msra.mxu0 0.0
  %341 = vmatpush.msra.mxu0 0.0
  %342 = vmatpush.msra.mxu0 0.0
  %343 = vmatpush.msra.mxu0 0.0
  %344 = vmatpush.msra.mxu0 0.0
  %345 = vmatpush.msra.mxu0 0.0
  %346 = vmatpush.msra.mxu0 0.0
  %347 = vmatpush.msra.mxu0 0.0
  %348 = vmatpush.msra.mxu0 0.0
  %349 = vmatpush.msra.mxu0 0.0
  %350 = vmatpush.msra.mxu0 0.0
  %351 = vmatpush.msra.mxu0 %v44
  %352 = vmatpush.msra.mxu0 %v43
  %353 = vmatpush.msra.mxu0 %v42
  %354 = vmatpush.msra.mxu0 %v41
  %355 = vmatmul.f32.gmra.mxu0 %v337
  %v356 = vpop.f32.mrf.mxu0
  %v357 = vadd.f32 %v80, %v356
  %358 = vdwg.mxu0
  %v361 = vsel %vm197, %v336, %v335
  %v362 = vsel %vm46, %v361, 0
  %364 = vmatpush.msra.mxu0 0.0
  %365 = vmatpush.msra.mxu0 0.0
  %366 = vmatpush.msra.mxu0 0.0
  %367 = vmatpush.msra.mxu0 0.0
  %368 = vmatpush.msra.mxu0 0.0
  %369 = vmatpush.msra.mxu0 0.0
  %370 = vmatpush.msra.mxu0 0.0
  %371 = vmatpush.msra.mxu0 0.0
  %372 = vmatpush.msra.mxu0 0.0
  %373 = vmatpush.msra.mxu0 0.0
  %374 = vmatpush.msra.mxu0 0.0
  %375 = vmatpush.msra.mxu0 0.0
  %376 = vmatpush.msra.mxu0 %v40
  %377 = vmatpush.msra.mxu0 %v39
  %378 = vmatpush.msra.mxu0 %v38
  %379 = vmatpush.msra.mxu0 %v37
  %380 = vmatmul.f32.gmra.mxu0 %v362
  %v381 = vpop.f32.mrf.mxu0
  %v382 = vadd.f32 %v357, %v381
  %383 = vdwg.mxu0
  %v384 = vtanh.pop %v382
  %v385 = vmul.f32 %v384, 0.5
  %v386 = vadd.f32 %v385, 0.5
  %v387 = vmul.f32 %v386, %v234
  %389 = vrot.lane.b32.xlu0 %v384, 64
  %v390 = vpop.permute.xlu0 %389
  %v392 = vmul.f32 %v386, %v390
  %394 = vrot.lane.b32.xlu0 %v392, 32
  %v395 = vpop.permute.xlu0 %394
  %v397 = vadd.f32 %v387, %v395
  %v398 = vtanh.pop %v397
  %400 = vrot.lane.b32.xlu0 %v398, 64
  %v401 = vpop.permute.xlu0 %400
  %v403 = vmul.f32 %v386, %v401
  %405 = vrot.lane.b32.xlu0 %v403, 32
  %v406 = vpop.permute.xlu0 %405
  %v408 = vsel %vm46, %v406, %v397
  %v410 = vsel %vm81, %v408, 0
  %412 = vmatpush.msra.mxu0 0.0
  %413 = vmatpush.msra.mxu0 0.0
  %414 = vmatpush.msra.mxu0 0.0
  %415 = vmatpush.msra.mxu0 0.0
  %416 = vmatpush.msra.mxu0 0.0
  %417 = vmatpush.msra.mxu0 0.0
  %418 = vmatpush.msra.mxu0 0.0
  %419 = vmatpush.msra.mxu0 0.0
  %420 = vmatpush.msra.mxu0 %v34
  %421 = vmatpush.msra.mxu0 %v33
  %422 = vmatpush.msra.mxu0 %v32
  %423 = vmatpush.msra.mxu0 %v31
  %424 = vmatpush.msra.mxu0 %v30
  %425 = vmatpush.msra.mxu0 %v29
  %426 = vmatpush.msra.mxu0 %v28
  %427 = vmatpush.msra.mxu0 %v27
  %428 = vmatmul.f32.gmra.mxu0 %v410
  %v429 = vpop.f32.mrf.mxu0
  %v430 = vadd.f32 0.0, %v429
  %431 = vdwg.mxu0
  %v433 = vrot.slane %v430, 1
  %v434 = vperm.slane %v430, 0
  %v435 = vperm.slane %v433, 0
  %v438 = vadd.f32 %v434, %v77
  %v439 = vadd.f32 %v435, %v78
  %v440 = vtanh.pop %v438
  %v441 = vtanh.pop %v439
  %v442 = vmul.f32 %v440, %v79
  %v443 = vmul.f32 %v441, %v79
  %v444 = vsel %vm46, %v442, 0.0
  %445 = vadd.xlane.f32.xlu0 %v444
  %v446 = vpop.xlane.xlu0 %445
  %v447 = vsel %vm46, %v443, 0.0
  %448 = vadd.xlane.f32.xlu0 %v447
  %v449 = vpop.xlane.xlu0 %448
  %v450 = vrot.slane %v446, 4
  %v451 = vmax.f32 %v446, %v450
  %v452 = vrot.slane %v451, 2
  %v453 = vmax.f32 %v451, %v452
  %v454 = vrot.slane %v453, 1
  %v455 = vmax.f32 %v453, %v454
  %v456 = vrot.slane %v449, 4
  %v457 = vmax.f32 %v449, %v456
  %v458 = vrot.slane %v457, 2
  %v459 = vmax.f32 %v457, %v458
  %v460 = vrot.slane %v459, 1
  %v461 = vmax.f32 %v459, %v460
  %v462 = vsub.f32 %v446, %v455
  %v463 = vsub.f32 %v449, %v461
  %v464 = vmul.f32 %v462, 1.442695
  %v465 = vpow.pop %v464
  %v466 = vmul.f32 %v463, 1.442695
  %v467 = vpow.pop %v466
  %v468 = vrot.slane %v465, 4
  %v469 = vadd.f32 %v465, %v468
  %v470 = vrot.slane %v469, 2
  %v471 = vadd.f32 %v469, %v470
  %v472 = vrot.slane %v471, 1
  %v473 = vadd.f32 %v471, %v472
  %v474 = vrot.slane %v467, 4
  %v475 = vadd.f32 %v467, %v474
  %v476 = vrot.slane %v475, 2
  %v477 = vadd.f32 %v475, %v476
  %v478 = vrot.slane %v477, 1
  %v479 = vadd.f32 %v477, %v478
  %v480 = vmul.f32 %v465, %v21
  %v481 = vmul.f32 %v467, %v22
  %v482 = vsel %vm46, %v480, 0.0
  %v483 = vrot.slane %v482, 4
  %v484 = vadd.f32 %v482, %v483
  %v485 = vrot.slane %v484, 2
  %v486 = vadd.f32 %v484, %v485
  %v487 = vrot.slane %v486, 1
  %v488 = vadd.f32 %v486, %v487
  %v489 = vsel %vm46, %v481, 0.0
  %v490 = vrot.slane %v489, 4
  %v491 = vadd.f32 %v489, %v490
  %v492 = vrot.slane %v491, 2
  %v493 = vadd.f32 %v491, %v492
  %v494 = vrot.slane %v493, 1
  %v495 = vadd.f32 %v493, %v494
  %v496 = vrcp.pop %v473
  %v497 = vrcp.pop %v479
  %v498 = vmul.f32 %v488, %v496
  %v499 = vmul.f32 %v495, %v497
  %v500 = vsel %vm46, %v406, 0
  %502 = vmatpush.msra.mxu0 0.0
  %503 = vmatpush.msra.mxu0 0.0
  %504 = vmatpush.msra.mxu0 0.0
  %505 = vmatpush.msra.mxu0 0.0
  %506 = vmatpush.msra.mxu0 0.0
  %507 = vmatpush.msra.mxu0 0.0
  %508 = vmatpush.msra.mxu0 0.0
  %509 = vmatpush.msra.mxu0 0.0
  %510 = vmatpush.msra.mxu0 0.0
  %511 = vmatpush.msra.mxu0 0.0
  %512 = vmatpush.msra.mxu0 0.0
  %513 = vmatpush.msra.mxu0 0.0
  %514 = vmatpush.msra.mxu0 %v44
  %515 = vmatpush.msra.mxu0 %v43
  %516 = vmatpush.msra.mxu0 %v42
  %517 = vmatpush.msra.mxu0 %v41
  %518 = vmatmul.f32.gmra.mxu0 %v500
  %v519 = vpop.f32.mrf.mxu0
  %v520 = vadd.f32 %v80, %v519
  %521 = vdwg.mxu0
  %v524 = vsel %vm197, %v499, %v498
  %v525 = vsel %vm46, %v524, 0
  %527 = vmatpush.msra.mxu0 0.0
  %528 = vmatpush.msra.mxu0 0.0
  %529 = vmatpush.msra.mxu0 0.0
  %530 = vmatpush.msra.mxu0 0.0
  %531 = vmatpush.msra.mxu0 0.0
  %532 = vmatpush.msra.mxu0 0.0
  %533 = vmatpush.msra.mxu0 0.0
  %534 = vmatpush.msra.mxu0 0.0
  %535 = vmatpush.msra.mxu0 0.0
  %536 = vmatpush.msra.mxu0 0.0
  %537 = vmatpush.msra.mxu0 0.0
  %538 = vmatpush.msra.mxu0 0.0
  %539 = vmatpush.msra.mxu0 %v40
  %540 = vmatpush.msra.mxu0 %v39
  %541 = vmatpush.msra.mxu0 %v38
  %542 = vmatpush.msra.mxu0 %v37
  %543 = vmatmul.f32.gmra.mxu0 %v525
  %v544 = vpop.f32.mrf.mxu0
  %v545 = vadd.f32 %v520, %v544
  %546 = vdwg.mxu0
  %v547 = vtanh.pop %v545
  %v548 = vmul.f32 %v547, 0.5
  %v549 = vadd.f32 %v548, 0.5
  %v550 = vmul.f32 %v549, %v397
  %552 = vrot.lane.b32.xlu0 %v547, 64
  %v553 = vpop.permute.xlu0 %552
  %v555 = vmul.f32 %v549, %v553
  %557 = vrot.lane.b32.xlu0 %v555, 32
  %v558 = vpop.permute.xlu0 %557
  %v560 = vadd.f32 %v550, %v558
  %v561 = vtanh.pop %v560
  %563 = vrot.lane.b32.xlu0 %v561, 64
  %v564 = vpop.permute.xlu0 %563
  %v566 = vmul.f32 %v549, %v564
  %568 = vrot.lane.b32.xlu0 %v566, 32
  %v569 = vpop.permute.xlu0 %568
  %v571 = vsel %vm46, %v569, %v560
  %v573 = vsel %vm81, %v571, 0
  %575 = vmatpush.msra.mxu0 0.0
  %576 = vmatpush.msra.mxu0 0.0
  %577 = vmatpush.msra.mxu0 0.0
  %578 = vmatpush.msra.mxu0 0.0
  %579 = vmatpush.msra.mxu0 0.0
  %580 = vmatpush.msra.mxu0 0.0
  %581 = vmatpush.msra.mxu0 0.0
  %582 = vmatpush.msra.mxu0 0.0
  %583 = vmatpush.msra.mxu0 %v34
  %584 = vmatpush.msra.mxu0 %v33
  %585 = vmatpush.msra.mxu0 %v32
  %586 = vmatpush.msra.mxu0 %v31
  %587 = vmatpush.msra.mxu0 %v30
  %588 = vmatpush.msra.mxu0 %v29
  %589 = vmatpush.msra.mxu0 %v28
  %590 = vmatpush.msra.mxu0 %v27
  %591 = vmatmul.f32.gmra.mxu0 %v573
  %v592 = vpop.f32.mrf.mxu0
  %v593 = vadd.f32 0.0, %v592
  %594 = vdwg.mxu0
  %v596 = vrot.slane %v593, 1
  %v597 = vperm.slane %v593, 0
  %v598 = vperm.slane %v596, 0
  %v601 = vadd.f32 %v597, %v77
  %v602 = vadd.f32 %v598, %v78
  %v603 = vtanh.pop %v601
  %v604 = vtanh.pop %v602
  %v605 = vmul.f32 %v603, %v79
  %v606 = vmul.f32 %v604, %v79
  %v607 = vsel %vm46, %v605, 0.0
  %608 = vadd.xlane.f32.xlu0 %v607
  %v609 = vpop.xlane.xlu0 %608
  %v610 = vsel %vm46, %v606, 0.0
  %611 = vadd.xlane.f32.xlu0 %v610
  %v612 = vpop.xlane.xlu0 %611
  %v613 = vrot.slane %v609, 4
  %v614 = vmax.f32 %v609, %v613
  %v615 = vrot.slane %v614, 2
  %v616 = vmax.f32 %v614, %v615
  %v617 = vrot.slane %v616, 1
  %v618 = vmax.f32 %v616, %v617
  %v619 = vrot.slane %v612, 4
  %v620 = vmax.f32 %v612, %v619
  %v621 = vrot.slane %v620, 2
  %v622 = vmax.f32 %v620, %v621
  %v623 = vrot.slane %v622, 1
  %v624 = vmax.f32 %v622, %v623
  %v625 = vsub.f32 %v609, %v618
  %v626 = vsub.f32 %v612, %v624
  %v627 = vmul.f32 %v625, 1.442695
  %v628 = vpow.pop %v627
  %v629 = vmul.f32 %v626, 1.442695
  %v630 = vpow.pop %v629
  %v631 = vrot.slane %v628, 4
  %v632 = vadd.f32 %v628, %v631
  %v633 = vrot.slane %v632, 2
  %v634 = vadd.f32 %v632, %v633
  %v635 = vrot.slane %v634, 1
  %v636 = vadd.f32 %v634, %v635
  %v637 = vrot.slane %v630, 4
  %v638 = vadd.f32 %v630, %v637
  %v639 = vrot.slane %v638, 2
  %v640 = vadd.f32 %v638, %v639
  %v641 = vrot.slane %v640, 1
  %v642 = vadd.f32 %v640, %v641
  %v643 = vmul.f32 %v628, %v21
  %v644 = vmul.f32 %v630, %v22
  %v645 = vsel %vm46, %v643, 0.0
  %v646 = vrot.slane %v645, 4
  %v647 = vadd.f32 %v645, %v646
  %v648 = vrot.slane %v647, 2
  %v649 = vadd.f32 %v647, %v648
  %v650 = vrot.slane %v649, 1
  %v651 = vadd.f32 %v649, %v650
  %v652 = vsel %vm46, %v644, 0.0
  %v653 = vrot.slane %v652, 4
  %v654 = vadd.f32 %v652, %v653
  %v655 = vrot.slane %v654, 2
  %v656 = vadd.f32 %v654, %v655
  %v657 = vrot.slane %v656, 1
  %v658 = vadd.f32 %v656, %v657
  %v659 = vrcp.pop %v636
  %v660 = vrcp.pop %v642
  %v661 = vmul.f32 %v651, %v659
  %v662 = vmul.f32 %v658, %v660
  %v663 = vsel %vm46, %v569, 0
  %665 = vmatpush.msra.mxu0 0.0
  %666 = vmatpush.msra.mxu0 0.0
  %667 = vmatpush.msra.mxu0 0.0
  %668 = vmatpush.msra.mxu0 0.0
  %669 = vmatpush.msra.mxu0 0.0
  %670 = vmatpush.msra.mxu0 0.0
  %671 = vmatpush.msra.mxu0 0.0
  %672 = vmatpush.msra.mxu0 0.0
  %673 = vmatpush.msra.mxu0 0.0
  %674 = vmatpush.msra.mxu0 0.0
  %675 = vmatpush.msra.mxu0 0.0
  %676 = vmatpush.msra.mxu0 0.0
  %677 = vmatpush.msra.mxu0 %v44
  %678 = vmatpush.msra.mxu0 %v43
  %679 = vmatpush.msra.mxu0 %v42
  %680 = vmatpush.msra.mxu0 %v41
  %681 = vmatmul.f32.gmra.mxu0 %v663
  %v682 = vpop.f32.mrf.mxu0
  %v683 = vadd.f32 %v80, %v682
  %684 = vdwg.mxu0
  %v687 = vsel %vm197, %v662, %v661
  %v688 = vsel %vm46, %v687, 0
  %690 = vmatpush.msra.mxu0 0.0
  %691 = vmatpush.msra.mxu0 0.0
  %692 = vmatpush.msra.mxu0 0.0
  %693 = vmatpush.msra.mxu0 0.0
  %694 = vmatpush.msra.mxu0 0.0
  %695 = vmatpush.msra.mxu0 0.0
  %696 = vmatpush.msra.mxu0 0.0
  %697 = vmatpush.msra.mxu0 0.0
  %698 = vmatpush.msra.mxu0 0.0
  %699 = vmatpush.msra.mxu0 0.0
  %700 = vmatpush.msra.mxu0 0.0
  %701 = vmatpush.msra.mxu0 0.0
  %702 = vmatpush.msra.mxu0 %v40
  %703 = vmatpush.msra.mxu0 %v39
  %704 = vmatpush.msra.mxu0 %v38
  %705 = vmatpush.msra.mxu0 %v37
  %706 = vmatmul.f32.gmra.mxu0 %v688
  %v707 = vpop.f32.mrf.mxu0
  %v708 = vadd.f32 %v683, %v707
  %709 = vdwg.mxu0
  %v710 = vtanh.pop %v708
  %v711 = vmul.f32 %v710, 0.5
  %v712 = vadd.f32 %v711, 0.5
  %v713 = vmul.f32 %v712, %v560
  %715 = vrot.lane.b32.xlu0 %v710, 64
  %v716 = vpop.permute.xlu0 %715
  %v718 = vmul.f32 %v712, %v716
  %720 = vrot.lane.b32.xlu0 %v718, 32
  %v721 = vpop.permute.xlu0 %720
  %v723 = vadd.f32 %v713, %v721
  %v724 = vtanh.pop %v723
  %726 = vrot.lane.b32.xlu0 %v724, 64
  %v727 = vpop.permute.xlu0 %726
  %v729 = vmul.f32 %v712, %v727
  %731 = vrot.lane.b32.xlu0 %v729, 32
  %v732 = vpop.permute.xlu0 %731
  %v734 = vsel %vm46, %v732, %v723
  %v736 = vsel %vm81, %v734, 0
  %738 = vmatpush.msra.mxu0 0.0
  %739 = vmatpush.msra.mxu0 0.0
  %740 = vmatpush.msra.mxu0 0.0
  %741 = vmatpush.msra.mxu0 0.0
  %742 = vmatpush.msra.mxu0 0.0
  %743 = vmatpush.msra.mxu0 0.0
  %744 = vmatpush.msra.mxu0 0.0
  %745 = vmatpush.msra.mxu0 0.0
  %746 = vmatpush.msra.mxu0 %v34
  %747 = vmatpush.msra.mxu0 %v33
  %748 = vmatpush.msra.mxu0 %v32
  %749 = vmatpush.msra.mxu0 %v31
  %750 = vmatpush.msra.mxu0 %v30
  %751 = vmatpush.msra.mxu0 %v29
  %752 = vmatpush.msra.mxu0 %v28
  %753 = vmatpush.msra.mxu0 %v27
  %754 = vmatmul.f32.gmra.mxu0 %v736
  %v755 = vpop.f32.mrf.mxu0
  %v756 = vadd.f32 0.0, %v755
  %757 = vdwg.mxu0
  %v759 = vrot.slane %v756, 1
  %v760 = vperm.slane %v756, 0
  %v761 = vperm.slane %v759, 0
  %v764 = vadd.f32 %v760, %v77
  %v765 = vadd.f32 %v761, %v78
  %v766 = vtanh.pop %v764
  %v767 = vtanh.pop %v765
  %v768 = vmul.f32 %v766, %v79
  %v769 = vmul.f32 %v767, %v79
  %v770 = vsel %vm46, %v768, 0.0
  %771 = vadd.xlane.f32.xlu0 %v770
  %v772 = vpop.xlane.xlu0 %771
  %v773 = vsel %vm46, %v769, 0.0
  %774 = vadd.xlane.f32.xlu0 %v773
  %v775 = vpop.xlane.xlu0 %774
  %v776 = vrot.slane %v772, 4
  %v777 = vmax.f32 %v772, %v776
  %v778 = vrot.slane %v777, 2
  %v779 = vmax.f32 %v777, %v778
  %v780 = vrot.slane %v779, 1
  %v781 = vmax.f32 %v779, %v780
  %v782 = vrot.slane %v775, 4
  %v783 = vmax.f32 %v775, %v782
  %v784 = vrot.slane %v783, 2
  %v785 = vmax.f32 %v783, %v784
  %v786 = vrot.slane %v785, 1
  %v787 = vmax.f32 %v785, %v786
  %v788 = vsub.f32 %v772, %v781
  %v789 = vsub.f32 %v775, %v787
  %v790 = vmul.f32 %v788, 1.442695
  %v791 = vpow.pop %v790
  %v792 = vmul.f32 %v789, 1.442695
  %v793 = vpow.pop %v792
  %v794 = vrot.slane %v791, 4
  %v795 = vadd.f32 %v791, %v794
  %v796 = vrot.slane %v795, 2
  %v797 = vadd.f32 %v795, %v796
  %v798 = vrot.slane %v797, 1
  %v799 = vadd.f32 %v797, %v798
  %v800 = vrot.slane %v793, 4
  %v801 = vadd.f32 %v793, %v800
  %v802 = vrot.slane %v801, 2
  %v803 = vadd.f32 %v801, %v802
  %v804 = vrot.slane %v803, 1
  %v805 = vadd.f32 %v803, %v804
  %v806 = vmul.f32 %v791, %v21
  %v807 = vmul.f32 %v793, %v22
  %v808 = vsel %vm46, %v806, 0.0
  %v809 = vrot.slane %v808, 4
  %v810 = vadd.f32 %v808, %v809
  %v811 = vrot.slane %v810, 2
  %v812 = vadd.f32 %v810, %v811
  %v813 = vrot.slane %v812, 1
  %v814 = vadd.f32 %v812, %v813
  %v815 = vsel %vm46, %v807, 0.0
  %v816 = vrot.slane %v815, 4
  %v817 = vadd.f32 %v815, %v816
  %v818 = vrot.slane %v817, 2
  %v819 = vadd.f32 %v817, %v818
  %v820 = vrot.slane %v819, 1
  %v821 = vadd.f32 %v819, %v820
  %v822 = vrcp.pop %v799
  %v823 = vrcp.pop %v805
  %v824 = vmul.f32 %v814, %v822
  %v825 = vmul.f32 %v821, %v823
  %v826 = vsel %vm46, %v732, 0
  %828 = vmatpush.msra.mxu0 0.0
  %829 = vmatpush.msra.mxu0 0.0
  %830 = vmatpush.msra.mxu0 0.0
  %831 = vmatpush.msra.mxu0 0.0
  %832 = vmatpush.msra.mxu0 0.0
  %833 = vmatpush.msra.mxu0 0.0
  %834 = vmatpush.msra.mxu0 0.0
  %835 = vmatpush.msra.mxu0 0.0
  %836 = vmatpush.msra.mxu0 0.0
  %837 = vmatpush.msra.mxu0 0.0
  %838 = vmatpush.msra.mxu0 0.0
  %839 = vmatpush.msra.mxu0 0.0
  %840 = vmatpush.msra.mxu0 %v44
  %841 = vmatpush.msra.mxu0 %v43
  %842 = vmatpush.msra.mxu0 %v42
  %843 = vmatpush.msra.mxu0 %v41
  %844 = vmatmul.f32.gmra.mxu0 %v826
  %v845 = vpop.f32.mrf.mxu0
  %v846 = vadd.f32 %v80, %v845
  %847 = vdwg.mxu0
  %v850 = vsel %vm197, %v825, %v824
  %v851 = vsel %vm46, %v850, 0
  %853 = vmatpush.msra.mxu0 0.0
  %854 = vmatpush.msra.mxu0 0.0
  %855 = vmatpush.msra.mxu0 0.0
  %856 = vmatpush.msra.mxu0 0.0
  %857 = vmatpush.msra.mxu0 0.0
  %858 = vmatpush.msra.mxu0 0.0
  %859 = vmatpush.msra.mxu0 0.0
  %860 = vmatpush.msra.mxu0 0.0
  %861 = vmatpush.msra.mxu0 0.0
  %862 = vmatpush.msra.mxu0 0.0
  %863 = vmatpush.msra.mxu0 0.0
  %864 = vmatpush.msra.mxu0 0.0
  %865 = vmatpush.msra.mxu0 %v40
  %866 = vmatpush.msra.mxu0 %v39
  %867 = vmatpush.msra.mxu0 %v38
  %868 = vmatpush.msra.mxu0 %v37
  %869 = vmatmul.f32.gmra.mxu0 %v851
  %v870 = vpop.f32.mrf.mxu0
  %v871 = vadd.f32 %v846, %v870
  %872 = vdwg.mxu0
  %v873 = vtanh.pop %v871
  %v874 = vmul.f32 %v873, 0.5
  %v875 = vadd.f32 %v874, 0.5
  %v876 = vmul.f32 %v875, %v723
  %878 = vrot.lane.b32.xlu0 %v873, 64
  %v879 = vpop.permute.xlu0 %878
  %v881 = vmul.f32 %v875, %v879
  %883 = vrot.lane.b32.xlu0 %v881, 32
  %v884 = vpop.permute.xlu0 %883
  %v886 = vadd.f32 %v876, %v884
  %v887 = vtanh.pop %v886
  %889 = vrot.lane.b32.xlu0 %v887, 64
  %v890 = vpop.permute.xlu0 %889
  %v892 = vmul.f32 %v875, %v890
  %894 = vrot.lane.b32.xlu0 %v892, 32
  %v895 = vpop.permute.xlu0 %894
  %v897 = vsel %vm46, %v895, %v886
  %v899 = vsel %vm81, %v897, 0
  %901 = vmatpush.msra.mxu0 0.0
  %902 = vmatpush.msra.mxu0 0.0
  %903 = vmatpush.msra.mxu0 0.0
  %904 = vmatpush.msra.mxu0 0.0
  %905 = vmatpush.msra.mxu0 0.0
  %906 = vmatpush.msra.mxu0 0.0
  %907 = vmatpush.msra.mxu0 0.0
  %908 = vmatpush.msra.mxu0 0.0
  %909 = vmatpush.msra.mxu0 %v34
  %910 = vmatpush.msra.mxu0 %v33
  %911 = vmatpush.msra.mxu0 %v32
  %912 = vmatpush.msra.mxu0 %v31
  %913 = vmatpush.msra.mxu0 %v30
  %914 = vmatpush.msra.mxu0 %v29
  %915 = vmatpush.msra.mxu0 %v28
  %916 = vmatpush.msra.mxu0 %v27
  %917 = vmatmul.f32.gmra.mxu0 %v899
  %v918 = vpop.f32.mrf.mxu0
  %v919 = vadd.f32 0.0, %v918
  %920 = vdwg.mxu0
  %v922 = vrot.slane %v919, 1
  %v923 = vperm.slane %v919, 0
  %v924 = vperm.slane %v922, 0
  %v927 = vadd.f32 %v923, %v77
  %v928 = vadd.f32 %v924, %v78
  %v929 = vtanh.pop %v927
  %v930 = vtanh.pop %v928
  %v931 = vmul.f32 %v929, %v79
  %v932 = vmul.f32 %v930, %v79
  %v933 = vsel %vm46, %v931, 0.0
  %934 = vadd.xlane.f32.xlu0 %v933
  %v935 = vpop.xlane.xlu0 %934
  %v936 = vsel %vm46, %v932, 0.0
  %937 = vadd.xlane.f32.xlu0 %v936
  %v938 = vpop.xlane.xlu0 %937
  %v939 = vrot.slane %v935, 4
  %v940 = vmax.f32 %v935, %v939
  %v941 = vrot.slane %v940, 2
  %v942 = vmax.f32 %v940, %v941
  %v943 = vrot.slane %v942, 1
  %v944 = vmax.f32 %v942, %v943
  %v945 = vrot.slane %v938, 4
  %v946 = vmax.f32 %v938, %v945
  %v947 = vrot.slane %v946, 2
  %v948 = vmax.f32 %v946, %v947
  %v949 = vrot.slane %v948, 1
  %v950 = vmax.f32 %v948, %v949
  %v951 = vsub.f32 %v935, %v944
  %v952 = vsub.f32 %v938, %v950
  %v953 = vmul.f32 %v951, 1.442695
  %v954 = vpow.pop %v953
  %v955 = vmul.f32 %v952, 1.442695
  %v956 = vpow.pop %v955
  %v957 = vrot.slane %v954, 4
  %v958 = vadd.f32 %v954, %v957
  %v959 = vrot.slane %v958, 2
  %v960 = vadd.f32 %v958, %v959
  %v961 = vrot.slane %v960, 1
  %v962 = vadd.f32 %v960, %v961
  %v963 = vrot.slane %v956, 4
  %v964 = vadd.f32 %v956, %v963
  %v965 = vrot.slane %v964, 2
  %v966 = vadd.f32 %v964, %v965
  %v967 = vrot.slane %v966, 1
  %v968 = vadd.f32 %v966, %v967
  %v969 = vmul.f32 %v954, %v21
  %v970 = vmul.f32 %v956, %v22
  %v971 = vsel %vm46, %v969, 0.0
  %v972 = vrot.slane %v971, 4
  %v973 = vadd.f32 %v971, %v972
  %v974 = vrot.slane %v973, 2
  %v975 = vadd.f32 %v973, %v974
  %v976 = vrot.slane %v975, 1
  %v977 = vadd.f32 %v975, %v976
  %v978 = vsel %vm46, %v970, 0.0
  %v979 = vrot.slane %v978, 4
  %v980 = vadd.f32 %v978, %v979
  %v981 = vrot.slane %v980, 2
  %v982 = vadd.f32 %v980, %v981
  %v983 = vrot.slane %v982, 1
  %v984 = vadd.f32 %v982, %v983
  %v985 = vrcp.pop %v962
  %v986 = vrcp.pop %v968
  %v987 = vmul.f32 %v977, %v985
  %v988 = vmul.f32 %v984, %v986
  %v989 = vsel %vm46, %v895, 0
  %991 = vmatpush.msra.mxu0 0.0
  %992 = vmatpush.msra.mxu0 0.0
  %993 = vmatpush.msra.mxu0 0.0
  %994 = vmatpush.msra.mxu0 0.0
  %995 = vmatpush.msra.mxu0 0.0
  %996 = vmatpush.msra.mxu0 0.0
  %997 = vmatpush.msra.mxu0 0.0
  %998 = vmatpush.msra.mxu0 0.0
  %999 = vmatpush.msra.mxu0 0.0
  %1000 = vmatpush.msra.mxu0 0.0
  %1001 = vmatpush.msra.mxu0 0.0
  %1002 = vmatpush.msra.mxu0 0.0
  %1003 = vmatpush.msra.mxu0 %v44
  %1004 = vmatpush.msra.mxu0 %v43
  %1005 = vmatpush.msra.mxu0 %v42
  %1006 = vmatpush.msra.mxu0 %v41
  %1007 = vmatmul.f32.gmra.mxu0 %v989
  %v1008 = vpop.f32.mrf.mxu0
  %v1009 = vadd.f32 %v80, %v1008
  %1010 = vdwg.mxu0
  %v1013 = vsel %vm197, %v988, %v987
  %v1014 = vsel %vm46, %v1013, 0
  %1016 = vmatpush.msra.mxu0 0.0
  %1017 = vmatpush.msra.mxu0 0.0
  %1018 = vmatpush.msra.mxu0 0.0
  %1019 = vmatpush.msra.mxu0 0.0
  %1020 = vmatpush.msra.mxu0 0.0
  %1021 = vmatpush.msra.mxu0 0.0
  %1022 = vmatpush.msra.mxu0 0.0
  %1023 = vmatpush.msra.mxu0 0.0
  %1024 = vmatpush.msra.mxu0 0.0
  %1025 = vmatpush.msra.mxu0 0.0
  %1026 = vmatpush.msra.mxu0 0.0
  %1027 = vmatpush.msra.mxu0 0.0
  %1028 = vmatpush.msra.mxu0 %v40
  %1029 = vmatpush.msra.mxu0 %v39
  %1030 = vmatpush.msra.mxu0 %v38
  %1031 = vmatpush.msra.mxu0 %v37
  %1032 = vmatmul.f32.gmra.mxu0 %v1014
  %v1033 = vpop.f32.mrf.mxu0
  %v1034 = vadd.f32 %v1009, %v1033
  %1035 = vdwg.mxu0
  %v1036 = vtanh.pop %v1034
  %v1037 = vmul.f32 %v1036, 0.5
  %v1038 = vadd.f32 %v1037, 0.5
  %v1039 = vmul.f32 %v1038, %v886
  %1041 = vrot.lane.b32.xlu0 %v1036, 64
  %v1042 = vpop.permute.xlu0 %1041
  %v1044 = vmul.f32 %v1038, %v1042
  %1046 = vrot.lane.b32.xlu0 %v1044, 32
  %v1047 = vpop.permute.xlu0 %1046
  %v1049 = vadd.f32 %v1039, %v1047
  %v1050 = vtanh.pop %v1049
  %1052 = vrot.lane.b32.xlu0 %v1050, 64
  %v1053 = vpop.permute.xlu0 %1052
  %v1055 = vmul.f32 %v1038, %v1053
  %1057 = vrot.lane.b32.xlu0 %v1055, 32
  %v1058 = vpop.permute.xlu0 %1057
  %v1060 = vsel %vm46, %v1058, %v1049
  %v1062 = vsel %vm81, %v1060, 0
  %1064 = vmatpush.msra.mxu0 0.0
  %1065 = vmatpush.msra.mxu0 0.0
  %1066 = vmatpush.msra.mxu0 0.0
  %1067 = vmatpush.msra.mxu0 0.0
  %1068 = vmatpush.msra.mxu0 0.0
  %1069 = vmatpush.msra.mxu0 0.0
  %1070 = vmatpush.msra.mxu0 0.0
  %1071 = vmatpush.msra.mxu0 0.0
  %1072 = vmatpush.msra.mxu0 %v34
  %1073 = vmatpush.msra.mxu0 %v33
  %1074 = vmatpush.msra.mxu0 %v32
  %1075 = vmatpush.msra.mxu0 %v31
  %1076 = vmatpush.msra.mxu0 %v30
  %1077 = vmatpush.msra.mxu0 %v29
  %1078 = vmatpush.msra.mxu0 %v28
  %1079 = vmatpush.msra.mxu0 %v27
  %1080 = vmatmul.f32.gmra.mxu0 %v1062
  %v1081 = vpop.f32.mrf.mxu0
  %v1082 = vadd.f32 0.0, %v1081
  %1083 = vdwg.mxu0
  %v1085 = vrot.slane %v1082, 1
  %v1086 = vperm.slane %v1082, 0
  %v1087 = vperm.slane %v1085, 0
  %v1090 = vadd.f32 %v1086, %v77
  %v1091 = vadd.f32 %v1087, %v78
  %v1092 = vtanh.pop %v1090
  %v1093 = vtanh.pop %v1091
  %v1094 = vmul.f32 %v1092, %v79
  %v1095 = vmul.f32 %v1093, %v79
  %v1096 = vsel %vm46, %v1094, 0.0
  %1097 = vadd.xlane.f32.xlu0 %v1096
  %v1098 = vpop.xlane.xlu0 %1097
  %v1099 = vsel %vm46, %v1095, 0.0
  %1100 = vadd.xlane.f32.xlu0 %v1099
  %v1101 = vpop.xlane.xlu0 %1100
  %v1102 = vrot.slane %v1098, 4
  %v1103 = vmax.f32 %v1098, %v1102
  %v1104 = vrot.slane %v1103, 2
  %v1105 = vmax.f32 %v1103, %v1104
  %v1106 = vrot.slane %v1105, 1
  %v1107 = vmax.f32 %v1105, %v1106
  %v1108 = vrot.slane %v1101, 4
  %v1109 = vmax.f32 %v1101, %v1108
  %v1110 = vrot.slane %v1109, 2
  %v1111 = vmax.f32 %v1109, %v1110
  %v1112 = vrot.slane %v1111, 1
  %v1113 = vmax.f32 %v1111, %v1112
  %v1114 = vsub.f32 %v1098, %v1107
  %v1115 = vsub.f32 %v1101, %v1113
  %v1116 = vmul.f32 %v1114, 1.442695
  %v1117 = vpow.pop %v1116
  %v1118 = vmul.f32 %v1115, 1.442695
  %v1119 = vpow.pop %v1118
  %v1120 = vrot.slane %v1117, 4
  %v1121 = vadd.f32 %v1117, %v1120
  %v1122 = vrot.slane %v1121, 2
  %v1123 = vadd.f32 %v1121, %v1122
  %v1124 = vrot.slane %v1123, 1
  %v1125 = vadd.f32 %v1123, %v1124
  %v1126 = vrot.slane %v1119, 4
  %v1127 = vadd.f32 %v1119, %v1126
  %v1128 = vrot.slane %v1127, 2
  %v1129 = vadd.f32 %v1127, %v1128
  %v1130 = vrot.slane %v1129, 1
  %v1131 = vadd.f32 %v1129, %v1130
  %v1132 = vmul.f32 %v1117, %v21
  %v1133 = vmul.f32 %v1119, %v22
  %v1134 = vsel %vm46, %v1132, 0.0
  %v1135 = vrot.slane %v1134, 4
  %v1136 = vadd.f32 %v1134, %v1135
  %v1137 = vrot.slane %v1136, 2
  %v1138 = vadd.f32 %v1136, %v1137
  %v1139 = vrot.slane %v1138, 1
  %v1140 = vadd.f32 %v1138, %v1139
  %v1141 = vsel %vm46, %v1133, 0.0
  %v1142 = vrot.slane %v1141, 4
  %v1143 = vadd.f32 %v1141, %v1142
  %v1144 = vrot.slane %v1143, 2
  %v1145 = vadd.f32 %v1143, %v1144
  %v1146 = vrot.slane %v1145, 1
  %v1147 = vadd.f32 %v1145, %v1146
  %v1148 = vrcp.pop %v1125
  %v1149 = vrcp.pop %v1131
  %v1150 = vmul.f32 %v1140, %v1148
  %v1151 = vmul.f32 %v1147, %v1149
  %v1152 = vsel %vm46, %v1058, 0
  %1154 = vmatpush.msra.mxu0 0.0
  %1155 = vmatpush.msra.mxu0 0.0
  %1156 = vmatpush.msra.mxu0 0.0
  %1157 = vmatpush.msra.mxu0 0.0
  %1158 = vmatpush.msra.mxu0 0.0
  %1159 = vmatpush.msra.mxu0 0.0
  %1160 = vmatpush.msra.mxu0 0.0
  %1161 = vmatpush.msra.mxu0 0.0
  %1162 = vmatpush.msra.mxu0 0.0
  %1163 = vmatpush.msra.mxu0 0.0
  %1164 = vmatpush.msra.mxu0 0.0
  %1165 = vmatpush.msra.mxu0 0.0
  %1166 = vmatpush.msra.mxu0 %v44
  %1167 = vmatpush.msra.mxu0 %v43
  %1168 = vmatpush.msra.mxu0 %v42
  %1169 = vmatpush.msra.mxu0 %v41
  %1170 = vmatmul.f32.gmra.mxu0 %v1152
  %v1171 = vpop.f32.mrf.mxu0
  %v1172 = vadd.f32 %v80, %v1171
  %1173 = vdwg.mxu0
  %v1176 = vsel %vm197, %v1151, %v1150
  %v1177 = vsel %vm46, %v1176, 0
  %1179 = vmatpush.msra.mxu0 0.0
  %1180 = vmatpush.msra.mxu0 0.0
  %1181 = vmatpush.msra.mxu0 0.0
  %1182 = vmatpush.msra.mxu0 0.0
  %1183 = vmatpush.msra.mxu0 0.0
  %1184 = vmatpush.msra.mxu0 0.0
  %1185 = vmatpush.msra.mxu0 0.0
  %1186 = vmatpush.msra.mxu0 0.0
  %1187 = vmatpush.msra.mxu0 0.0
  %1188 = vmatpush.msra.mxu0 0.0
  %1189 = vmatpush.msra.mxu0 0.0
  %1190 = vmatpush.msra.mxu0 0.0
  %1191 = vmatpush.msra.mxu0 %v40
  %1192 = vmatpush.msra.mxu0 %v39
  %1193 = vmatpush.msra.mxu0 %v38
  %1194 = vmatpush.msra.mxu0 %v37
  %1195 = vmatmul.f32.gmra.mxu0 %v1177
  %v1196 = vpop.f32.mrf.mxu0
  %v1197 = vadd.f32 %v1172, %v1196
  %1198 = vdwg.mxu0
  %v1199 = vtanh.pop %v1197
  %v1200 = vmul.f32 %v1199, 0.5
  %v1201 = vadd.f32 %v1200, 0.5
  %v1202 = vmul.f32 %v1201, %v1049
  %1204 = vrot.lane.b32.xlu0 %v1199, 64
  %v1205 = vpop.permute.xlu0 %1204
  %v1207 = vmul.f32 %v1201, %v1205
  %1209 = vrot.lane.b32.xlu0 %v1207, 32
  %v1210 = vpop.permute.xlu0 %1209
  %v1212 = vadd.f32 %v1202, %v1210
  %v1213 = vtanh.pop %v1212
  %1215 = vrot.lane.b32.xlu0 %v1213, 64
  %v1216 = vpop.permute.xlu0 %1215
  %v1218 = vmul.f32 %v1201, %v1216
  %1220 = vrot.lane.b32.xlu0 %v1218, 32
  %v1221 = vpop.permute.xlu0 %1220
  %v1223 = vsel %vm46, %v1221, %v1212
  %v1225 = vsel %vm81, %v1223, 0
  %1227 = vmatpush.msra.mxu0 0.0
  %1228 = vmatpush.msra.mxu0 0.0
  %1229 = vmatpush.msra.mxu0 0.0
  %1230 = vmatpush.msra.mxu0 0.0
  %1231 = vmatpush.msra.mxu0 0.0
  %1232 = vmatpush.msra.mxu0 0.0
  %1233 = vmatpush.msra.mxu0 0.0
  %1234 = vmatpush.msra.mxu0 0.0
  %1235 = vmatpush.msra.mxu0 %v34
  %1236 = vmatpush.msra.mxu0 %v33
  %1237 = vmatpush.msra.mxu0 %v32
  %1238 = vmatpush.msra.mxu0 %v31
  %1239 = vmatpush.msra.mxu0 %v30
  %1240 = vmatpush.msra.mxu0 %v29
  %1241 = vmatpush.msra.mxu0 %v28
  %1242 = vmatpush.msra.mxu0 %v27
  %1243 = vmatmul.f32.gmra.mxu0 %v1225
  %v1244 = vpop.f32.mrf.mxu0
  %v1245 = vadd.f32 0.0, %v1244
  %1246 = vdwg.mxu0
  %v1248 = vrot.slane %v1245, 1
  %v1249 = vperm.slane %v1245, 0
  %v1250 = vperm.slane %v1248, 0
  %v1253 = vadd.f32 %v1249, %v77
  %v1254 = vadd.f32 %v1250, %v78
  %v1255 = vtanh.pop %v1253
  %v1256 = vtanh.pop %v1254
  %v1257 = vmul.f32 %v1255, %v79
  %v1258 = vmul.f32 %v1256, %v79
  %v1259 = vsel %vm46, %v1257, 0.0
  %1260 = vadd.xlane.f32.xlu0 %v1259
  %v1261 = vpop.xlane.xlu0 %1260
  %v1262 = vsel %vm46, %v1258, 0.0
  %1263 = vadd.xlane.f32.xlu0 %v1262
  %v1264 = vpop.xlane.xlu0 %1263
  %v1265 = vrot.slane %v1261, 4
  %v1266 = vmax.f32 %v1261, %v1265
  %v1267 = vrot.slane %v1266, 2
  %v1268 = vmax.f32 %v1266, %v1267
  %v1269 = vrot.slane %v1268, 1
  %v1270 = vmax.f32 %v1268, %v1269
  %v1271 = vrot.slane %v1264, 4
  %v1272 = vmax.f32 %v1264, %v1271
  %v1273 = vrot.slane %v1272, 2
  %v1274 = vmax.f32 %v1272, %v1273
  %v1275 = vrot.slane %v1274, 1
  %v1276 = vmax.f32 %v1274, %v1275
  %v1277 = vsub.f32 %v1261, %v1270
  %v1278 = vsub.f32 %v1264, %v1276
  %v1279 = vmul.f32 %v1277, 1.442695
  %v1280 = vpow.pop %v1279
  %v1281 = vmul.f32 %v1278, 1.442695
  %v1282 = vpow.pop %v1281
  %v1283 = vrot.slane %v1280, 4
  %v1284 = vadd.f32 %v1280, %v1283
  %v1285 = vrot.slane %v1284, 2
  %v1286 = vadd.f32 %v1284, %v1285
  %v1287 = vrot.slane %v1286, 1
  %v1288 = vadd.f32 %v1286, %v1287
  %v1289 = vrot.slane %v1282, 4
  %v1290 = vadd.f32 %v1282, %v1289
  %v1291 = vrot.slane %v1290, 2
  %v1292 = vadd.f32 %v1290, %v1291
  %v1293 = vrot.slane %v1292, 1
  %v1294 = vadd.f32 %v1292, %v1293
  %v1295 = vmul.f32 %v1280, %v21
  %v1296 = vmul.f32 %v1282, %v22
  %v1297 = vsel %vm46, %v1295, 0.0
  %v1298 = vrot.slane %v1297, 4
  %v1299 = vadd.f32 %v1297, %v1298
  %v1300 = vrot.slane %v1299, 2
  %v1301 = vadd.f32 %v1299, %v1300
  %v1302 = vrot.slane %v1301, 1
  %v1303 = vadd.f32 %v1301, %v1302
  %v1304 = vsel %vm46, %v1296, 0.0
  %v1305 = vrot.slane %v1304, 4
  %v1306 = vadd.f32 %v1304, %v1305
  %v1307 = vrot.slane %v1306, 2
  %v1308 = vadd.f32 %v1306, %v1307
  %v1309 = vrot.slane %v1308, 1
  %v1310 = vadd.f32 %v1308, %v1309
  %v1311 = vrcp.pop %v1288
  %v1312 = vrcp.pop %v1294
  %v1313 = vmul.f32 %v1303, %v1311
  %v1314 = vmul.f32 %v1310, %v1312
  %v1315 = vsel %vm46, %v1221, 0
  %1317 = vmatpush.msra.mxu0 0.0
  %1318 = vmatpush.msra.mxu0 0.0
  %1319 = vmatpush.msra.mxu0 0.0
  %1320 = vmatpush.msra.mxu0 0.0
  %1321 = vmatpush.msra.mxu0 0.0
  %1322 = vmatpush.msra.mxu0 0.0
  %1323 = vmatpush.msra.mxu0 0.0
  %1324 = vmatpush.msra.mxu0 0.0
  %1325 = vmatpush.msra.mxu0 0.0
  %1326 = vmatpush.msra.mxu0 0.0
  %1327 = vmatpush.msra.mxu0 0.0
  %1328 = vmatpush.msra.mxu0 0.0
  %1329 = vmatpush.msra.mxu0 %v44
  %1330 = vmatpush.msra.mxu0 %v43
  %1331 = vmatpush.msra.mxu0 %v42
  %1332 = vmatpush.msra.mxu0 %v41
  %1333 = vmatmul.f32.gmra.mxu0 %v1315
  %v1334 = vpop.f32.mrf.mxu0
  %v1335 = vadd.f32 %v80, %v1334
  %1336 = vdwg.mxu0
  %v1339 = vsel %vm197, %v1314, %v1313
  %v1340 = vsel %vm46, %v1339, 0
  %1342 = vmatpush.msra.mxu0 0.0
  %1343 = vmatpush.msra.mxu0 0.0
  %1344 = vmatpush.msra.mxu0 0.0
  %1345 = vmatpush.msra.mxu0 0.0
  %1346 = vmatpush.msra.mxu0 0.0
  %1347 = vmatpush.msra.mxu0 0.0
  %1348 = vmatpush.msra.mxu0 0.0
  %1349 = vmatpush.msra.mxu0 0.0
  %1350 = vmatpush.msra.mxu0 0.0
  %1351 = vmatpush.msra.mxu0 0.0
  %1352 = vmatpush.msra.mxu0 0.0
  %1353 = vmatpush.msra.mxu0 0.0
  %1354 = vmatpush.msra.mxu0 %v40
  %1355 = vmatpush.msra.mxu0 %v39
  %1356 = vmatpush.msra.mxu0 %v38
  %1357 = vmatpush.msra.mxu0 %v37
  %1358 = vmatmul.f32.gmra.mxu0 %v1340
  %v1359 = vpop.f32.mrf.mxu0
  %v1360 = vadd.f32 %v1335, %v1359
  %1361 = vdwg.mxu0
  %v1362 = vtanh.pop %v1360
  %v1363 = vmul.f32 %v1362, 0.5
  %v1364 = vadd.f32 %v1363, 0.5
  %v1365 = vmul.f32 %v1364, %v1212
  %1367 = vrot.lane.b32.xlu0 %v1362, 64
  %v1368 = vpop.permute.xlu0 %1367
  %v1370 = vmul.f32 %v1364, %v1368
  %1372 = vrot.lane.b32.xlu0 %v1370, 32
  %v1373 = vpop.permute.xlu0 %1372
  %v1375 = vadd.f32 %v1365, %v1373
  %v1376 = vtanh.pop %v1375
  %1378 = vrot.lane.b32.xlu0 %v1376, 64
  %v1379 = vpop.permute.xlu0 %1378
  %v1381 = vmul.f32 %v1364, %v1379
  %1383 = vrot.lane.b32.xlu0 %v1381, 32
  %v1384 = vpop.permute.xlu0 %1383
  %1386 = vrot.lane.b32.xlu0 %v1339, 32
  %v1387 = vpop.permute.xlu0 %1386
  %v1389 = vsel %vm46, %v1384, %v1387
  %v1390 = vld [vmem:[%s3] sm:$0xff]
  %v1391 = vld [vmem:[%s3 + $0x8] sm:$0xff]
  %v1392 = vld [vmem:[%s3 + $0x10] sm:$0xff]
  %v1393 = vld [vmem:[%s3 + $0x18] sm:$0xff]
  %v1394 = vld [vmem:[%s3 + $0x20] sm:$0xff]
  %v1395 = vld [vmem:[%s3 + $0x28] sm:$0xff]
  %v1396 = vld [vmem:[%s3 + $0x30] sm:$0xff]
  %v1397 = vld [vmem:[%s3 + $0x38] sm:$0xff]
  %s1398 = sld [smem:[#allocation2]]
  %v1399 = vstv %s1398
  %v1401 = vsel %vm81, %v1389, 0
  %1403 = vmatpush.msra.mxu0 0.0
  %1404 = vmatpush.msra.mxu0 0.0
  %1405 = vmatpush.msra.mxu0 0.0
  %1406 = vmatpush.msra.mxu0 0.0
  %1407 = vmatpush.msra.mxu0 0.0
  %1408 = vmatpush.msra.mxu0 0.0
  %1409 = vmatpush.msra.mxu0 0.0
  %1410 = vmatpush.msra.mxu0 0.0
  %1411 = vmatpush.msra.mxu0 %v1397
  %1412 = vmatpush.msra.mxu0 %v1396
  %1413 = vmatpush.msra.mxu0 %v1395
  %1414 = vmatpush.msra.mxu0 %v1394
  %1415 = vmatpush.msra.mxu0 %v1393
  %1416 = vmatpush.msra.mxu0 %v1392
  %1417 = vmatpush.msra.mxu0 %v1391
  %1418 = vmatpush.msra.mxu0 %v1390
  %1419 = vmatmul.f32.gmra.mxu0 %v1401
  %v1420 = vpop.f32.mrf.mxu0
  %v1421 = vadd.f32 %v1399, %v1420
  %1422 = vdwg.mxu0
  %vm1423 = vcmask 1024
  %1424 = vst.msk [vmem:[%s5] sm:$0x3] %vm1423, %v1421
  // Predicated region
  $region22: #{tpu_custom_call.1} parent=0 // pred_check
    _
  $region23: #{tpu_custom_call.1} parent=0 // pred_check_branch
    %1426 = sbr.rel (0) target = $region25
  $region24: #{tpu_custom_call.1} parent=0 // pred_region
    _
  $region25: #{tpu_custom_call.1} parent=0 // pred_fallthru
    _
  // Predicated region
  $region26: #{tpu_custom_call.1} parent=0 // pred_check
    _
  $region27: #{tpu_custom_call.1} parent=0 // pred_check_branch
    %1428 = sbr.rel (0) target = $region29
  $region28: #{tpu_custom_call.1} parent=0 // pred_region
    _
  $region29: #{tpu_custom_call.1} parent=0 // pred_fallthru
    _

</llo_original>
